<compile_context>
chip_gen: v7x
topology: tpu7x:2x2x1
jax: 0.10.0
libtpu: 0.0.40
codegen_flags: <defaults>
</compile_context>

<pallas_src>
import jax
import jax.numpy as jnp
from jax.experimental import pallas as pl
from jax.experimental.pallas import tpu as pltpu


def _round_up(a, m):
    return ((a + m - 1) // m) * m


def _make_fused_kernel(c_in, c_out, w):
    """conv1x1 (VPU FMAs, SMEM scalar weights) fused with 2x2 nearest replication.

    Block shapes seen by the kernel body:
      w_ref: (c_out, c_in) f32   SMEM
      b_ref: (c_out,)      f32   SMEM
      x_ref: (c_in, tile_h, w)   VMEM
      o_ref: (c_out, tile_h, 4w) VMEM; row h = [out_row_{2h} | out_row_{2h+1}]
    """
    two_w = 2 * w

    def kernel(w_ref, b_ref, x_ref, o_ref):
        # Load every input channel once; reuse across all output channels.
        xs = [x_ref[c].astype(jnp.float32) for c in range(c_in)]

        # Constant 0/1 expansion matrix S4 (w, 4w):
        #   S4[j, k] = 1  iff  k in {2j, 2j+1, 2j+2w, 2j+2w+1}
        # so (acc @ S4)[h, k] = acc[h, (k mod 2w) // 2]  — i.e. the W-duplicated
        # output row, written twice back-to-back (the H duplication).  Built with
        # 2-D iota + comparisons only (no int div/mod, no reshapes, no strided
        # stores), recomputed per grid step (tiny VPU cost, zero HBM traffic).
        k_idx = jax.lax.broadcasted_iota(jnp.int32, (w, 4 * w), 1)
        j_idx = jax.lax.broadcasted_iota(jnp.int32, (w, 4 * w), 0)
        d = k_idx - 2 * j_idx
        s4 = ((d == 0) | (d == 1) | (d == two_w) | (d == two_w + 1)).astype(
            jnp.float32
        )

        for o in range(c_out):
            acc = xs[0] * w_ref[o, 0]
            for c in range(1, c_in):
                acc = acc + xs[c] * w_ref[o, c]
            acc = acc + b_ref[o]
            # MXU "spread": a pure-selection matmul; HIGHEST keeps the full f32
            # mantissa through the MXU so the duplication is (near-)exact.
            quad = jnp.dot(
                acc,
                s4,
                preferred_element_type=jnp.float32,
                precision=jax.lax.Precision.HIGHEST,
            )
            o_ref[o] = quad.astype(o_ref.dtype)

    return kernel


def _pick_tile_h(n, h, w, c_in, c_out, itemsize, vmem_budget_bytes):
    """Largest H-row tile whose double-buffered, padded in+out blocks fit the budget."""
    lane = 128
    # Padded VMEM bytes that one H-row contributes to the in / out blocks.
    in_row = c_in * _round_up(w, lane) * itemsize
    out_row = c_out * _round_up(4 * w, lane) * itemsize
    per_row = 2 * (in_row + out_row)  # double-buffered
    # Reserve headroom for the in-kernel f32 expansion matrix + iota temporaries.
    budget = max(vmem_budget_bytes - 8 * w * (4 * w) * 4, vmem_budget_bytes // 2)
    th = max(1, budget // per_row)
    if th < h:
        th = max(8, (th // 8) * 8)  # non-full sublane extent must be a multiple of 8
    th = min(th, h)
    # v7x has two TensorCores per chip: keep >= 2 steps on a "parallel" grid axis.
    if n * pl.cdiv(h, th) < 2 and h > 8:
        th = min(th, _round_up(pl.cdiv(h, 2), 8))
    return th


def upsample_conv_nchw(x, w_mat, bias, *, tile_h=None,
                       vmem_budget_bytes=20 * 1024 * 1024):
    """Fused y = conv1x1(nearest_up2x(x)) for NCHW x.

    Returns the result packed as (N, C_out, H, 4W); the caller reshapes it to
    (N, C_out, 2H, 2W), which is a free row-major metadata reshape.
    """
    n, c_in, h, w = x.shape
    c_out, _ = w_mat.shape
    itemsize = jnp.dtype(x.dtype).itemsize
    if tile_h is None:
        tile_h = _pick_tile_h(n, h, w, c_in, c_out, itemsize, vmem_budget_bytes)

    grid = (n, pl.cdiv(h, tile_h))
    kernel = _make_fused_kernel(c_in, c_out, w)

    return pl.pallas_call(
        kernel,
        out_shape=jax.ShapeDtypeStruct((n, c_out, h, 4 * w), x.dtype),
        grid_spec=pltpu.PrefetchScalarGridSpec(
            num_scalar_prefetch=0,
            grid=grid,
            in_specs=[
                # tiny weight / bias tables live in SMEM for scalar reads
                pl.BlockSpec(memory_space=pltpu.MemorySpace.SMEM),
                pl.BlockSpec(memory_space=pltpu.MemorySpace.SMEM),
                # NCHW input: all channels, a tile of H rows, full W on lanes
                pl.BlockSpec((None, c_in, tile_h, w), lambda b, i: (b, 0, i, 0)),
            ],
            out_specs=pl.BlockSpec(
                (None, c_out, tile_h, 4 * w), lambda b, i: (b, 0, i, 0)
            ),
        ),
        compiler_params=pltpu.CompilerParams(
            dimension_semantics=("parallel", "parallel"),
            vmem_limit_bytes=48 * 1024 * 1024,
        ),
    )(w_mat.astype(jnp.float32), bias.astype(jnp.float32), x)


@jax.jit
def upsample_forward(x_nchw, weight, bias):
    """Equivalent of UpSample(channels).forward(x) for NCHW input.

    weight: (C_out, C_in, 1, 1) PyTorch Conv2d OIHW layout; bias: (C_out,).
    Works for f32 or bf16 x (bf16 halves all HBM traffic; accumulation stays f32).
    """
    n, c, h, w = x_nchw.shape
    c_out = weight.shape[0]
    w_mat = weight.reshape(c_out, c)
    y4 = upsample_conv_nchw(x_nchw, w_mat, bias)  # (N, C_out, H, 4W)
    # (N, C_out, H, 4W) -> (N, C_out, 2H, 2W): pure metadata (bitcast) reshape.
    return y4.reshape(n, c_out, 2 * h, 2 * w)


if __name__ == "__main__":
    key = jax.random.PRNGKey(0)
    k_x, k_w, k_b = jax.random.split(key, 3)

    N, C, H, W = 2, 4, 16, 16
    C_out = C // 2

    x = jax.random.normal(k_x, (N, C, H, W), dtype=jnp.float32)
    weight = jax.random.normal(k_w, (C_out, C, 1, 1), dtype=jnp.float32) * 0.1
    bias = jax.random.normal(k_b, (C_out,), dtype=jnp.float32) * 0.1

    y = jax.block_until_ready(upsample_forward(x, weight, bias))

    # pure-JAX reference in the module's original order: upsample, then conv
    # (exact f32 elementwise math, no reduced-precision matmul path).
    x_up = jnp.repeat(jnp.repeat(x, 2, axis=2), 2, axis=3)
    wmat = weight.reshape(C_out, C)
    y_ref = (x_up[:, None] * wmat[None, :, :, None, None]).sum(axis=2)
    y_ref = y_ref + bias[None, :, None, None]

    assert y.shape == (N, C_out, 2 * H, 2 * W)
    assert jnp.allclose(y, y_ref, atol=1e-5, rtol=1e-5)

    print("KERNEL_OK")
</pallas_src>

<mosaic_0001>
module attributes {stable_mosaic.version = 11 : i64} {
  func.func @kernel(%arg0: i32, %arg1: i32, %arg2: memref<2x4xf32, #tpu.memory_space<smem>>, %arg3: memref<2xf32, #tpu.memory_space<smem>>, %arg4: memref<1x4x16x16xf32, #tpu.memory_space<vmem>>, %arg5: memref<1x2x16x64xf32, #tpu.memory_space<vmem>>) attributes {dimension_semantics = [#tpu.dimension_semantics<parallel>, #tpu.dimension_semantics<parallel>], iteration_bounds = array<i64: 2, 1>, scalar_prefetch = 0 : i64, scratch_operands = 0 : i64, tpu.core_type = #tpu.core_type<tc>, window_params = [{transform_indices = @transform_0, window_bounds = array<i64: 2, 4>}, {transform_indices = @transform_1, window_bounds = array<i64: 2>}, {transform_indices = @transform_2, window_bounds = array<i64: 1, 4, 16, 16>}, {transform_indices = @transform_3, window_bounds = array<i64: 1, 2, 16, 64>}]} {
    %c0 = arith.constant 0 : index
    %c0_0 = arith.constant 0 : index
    %c0_1 = arith.constant 0 : index
    %c0_2 = arith.constant 0 : index
    %0 = vector.load %arg4[%c0, %c0_0, %c0_1, %c0_2] : memref<1x4x16x16xf32, #tpu.memory_space<vmem>>, vector<1x1x16x16xf32>
    %1 = vector.shape_cast %0 : vector<1x1x16x16xf32> to vector<16x16xf32>
    %c0_3 = arith.constant 0 : index
    %c1 = arith.constant 1 : index
    %c0_4 = arith.constant 0 : index
    %c0_5 = arith.constant 0 : index
    %2 = vector.load %arg4[%c0_3, %c1, %c0_4, %c0_5] : memref<1x4x16x16xf32, #tpu.memory_space<vmem>>, vector<1x1x16x16xf32>
    %3 = vector.shape_cast %2 : vector<1x1x16x16xf32> to vector<16x16xf32>
    %c0_6 = arith.constant 0 : index
    %c2 = arith.constant 2 : index
    %c0_7 = arith.constant 0 : index
    %c0_8 = arith.constant 0 : index
    %4 = vector.load %arg4[%c0_6, %c2, %c0_7, %c0_8] : memref<1x4x16x16xf32, #tpu.memory_space<vmem>>, vector<1x1x16x16xf32>
    %5 = vector.shape_cast %4 : vector<1x1x16x16xf32> to vector<16x16xf32>
    %c0_9 = arith.constant 0 : index
    %c3 = arith.constant 3 : index
    %c0_10 = arith.constant 0 : index
    %c0_11 = arith.constant 0 : index
    %6 = vector.load %arg4[%c0_9, %c3, %c0_10, %c0_11] : memref<1x4x16x16xf32, #tpu.memory_space<vmem>>, vector<1x1x16x16xf32>
    %7 = vector.shape_cast %6 : vector<1x1x16x16xf32> to vector<16x16xf32>
    %8 = tpu.iota {dimensions = array<i32: 1>} : vector<16x64xi32>
    %9 = tpu.iota {dimensions = array<i32: 0>} : vector<16x64xi32>
    %c2_i32 = arith.constant 2 : i32
    %10 = vector.broadcast %c2_i32 : i32 to vector<16x64xi32>
    %11 = arith.muli %10, %9 : vector<16x64xi32>
    %12 = arith.subi %8, %11 : vector<16x64xi32>
    %c0_i32 = arith.constant 0 : i32
    %13 = vector.broadcast %c0_i32 : i32 to vector<16x64xi32>
    %14 = arith.cmpi eq, %12, %13 : vector<16x64xi32>
    %c1_i32 = arith.constant 1 : i32
    %15 = vector.broadcast %c1_i32 : i32 to vector<16x64xi32>
    %16 = arith.cmpi eq, %12, %15 : vector<16x64xi32>
    %17 = arith.ori %14, %16 : vector<16x64xi1>
    %c32_i32 = arith.constant 32 : i32
    %18 = vector.broadcast %c32_i32 : i32 to vector<16x64xi32>
    %19 = arith.cmpi eq, %12, %18 : vector<16x64xi32>
    %20 = arith.ori %17, %19 : vector<16x64xi1>
    %c33_i32 = arith.constant 33 : i32
    %21 = vector.broadcast %c33_i32 : i32 to vector<16x64xi32>
    %22 = arith.cmpi eq, %12, %21 : vector<16x64xi32>
    %23 = arith.ori %20, %22 : vector<16x64xi1>
    %24 = arith.extui %23 : vector<16x64xi1> to vector<16x64xi32>
    %25 = arith.sitofp %24 : vector<16x64xi32> to vector<16x64xf32>
    %c0_12 = arith.constant 0 : index
    %c0_13 = arith.constant 0 : index
    %26 = memref.load %arg2[%c0_12, %c0_13] : memref<2x4xf32, #tpu.memory_space<smem>>
    %27 = vector.broadcast %26 : f32 to vector<16x16xf32>
    %28 = arith.mulf %1, %27 : vector<16x16xf32>
    %c0_14 = arith.constant 0 : index
    %c1_15 = arith.constant 1 : index
    %29 = memref.load %arg2[%c0_14, %c1_15] : memref<2x4xf32, #tpu.memory_space<smem>>
    %30 = vector.broadcast %29 : f32 to vector<16x16xf32>
    %31 = arith.mulf %3, %30 : vector<16x16xf32>
    %32 = arith.addf %28, %31 : vector<16x16xf32>
    %c0_16 = arith.constant 0 : index
    %c2_17 = arith.constant 2 : index
    %33 = memref.load %arg2[%c0_16, %c2_17] : memref<2x4xf32, #tpu.memory_space<smem>>
    %34 = vector.broadcast %33 : f32 to vector<16x16xf32>
    %35 = arith.mulf %5, %34 : vector<16x16xf32>
    %36 = arith.addf %32, %35 : vector<16x16xf32>
    %c0_18 = arith.constant 0 : index
    %c3_19 = arith.constant 3 : index
    %37 = memref.load %arg2[%c0_18, %c3_19] : memref<2x4xf32, #tpu.memory_space<smem>>
    %38 = vector.broadcast %37 : f32 to vector<16x16xf32>
    %39 = arith.mulf %7, %38 : vector<16x16xf32>
    %40 = arith.addf %36, %39 : vector<16x16xf32>
    %c0_20 = arith.constant 0 : index
    %41 = memref.load %arg3[%c0_20] : memref<2xf32, #tpu.memory_space<smem>>
    %42 = vector.broadcast %41 : f32 to vector<16x16xf32>
    %43 = arith.addf %40, %42 : vector<16x16xf32>
    %cst = arith.constant dense<0.000000e+00> : vector<16x64xf32>
    %44 = tpu.matmul %43, %25, %cst {dimension_numbers = #tpu.dot_dimension_numbers<[1], [0], [0], [1], [0, 0, 1, 1], [], []>, precision = #tpu.contract_precision<fp32>} : vector<16x16xf32>, vector<16x64xf32>, vector<16x64xf32> -> vector<16x64xf32>
    %c0_21 = arith.constant 0 : index
    %c0_22 = arith.constant 0 : index
    %c0_23 = arith.constant 0 : index
    %c0_24 = arith.constant 0 : index
    %45 = vector.load %arg5[%c0_21, %c0_22, %c0_23, %c0_24] : memref<1x2x16x64xf32, #tpu.memory_space<vmem>>, vector<1x1x16x64xf32>
    %46 = vector.shape_cast %45 : vector<1x1x16x64xf32> to vector<16x64xf32>
    %47 = vector.shape_cast %44 : vector<16x64xf32> to vector<1x1x16x64xf32>
    tpu.vector_store %arg5[%c0_21, %c0_22, %c0_23, %c0_24], %47 {strides = array<i32>} : memref<1x2x16x64xf32, #tpu.memory_space<vmem>>, vector<1x1x16x64xf32>,
    %c1_25 = arith.constant 1 : index
    %c0_26 = arith.constant 0 : index
    %48 = memref.load %arg2[%c1_25, %c0_26] : memref<2x4xf32, #tpu.memory_space<smem>>
    %49 = vector.broadcast %48 : f32 to vector<16x16xf32>
    %50 = arith.mulf %1, %49 : vector<16x16xf32>
    %c1_27 = arith.constant 1 : index
    %c1_28 = arith.constant 1 : index
    %51 = memref.load %arg2[%c1_27, %c1_28] : memref<2x4xf32, #tpu.memory_space<smem>>
    %52 = vector.broadcast %51 : f32 to vector<16x16xf32>
    %53 = arith.mulf %3, %52 : vector<16x16xf32>
    %54 = arith.addf %50, %53 : vector<16x16xf32>
    %c1_29 = arith.constant 1 : index
    %c2_30 = arith.constant 2 : index
    %55 = memref.load %arg2[%c1_29, %c2_30] : memref<2x4xf32, #tpu.memory_space<smem>>
    %56 = vector.broadcast %55 : f32 to vector<16x16xf32>
    %57 = arith.mulf %5, %56 : vector<16x16xf32>
    %58 = arith.addf %54, %57 : vector<16x16xf32>
    %c1_31 = arith.constant 1 : index
    %c3_32 = arith.constant 3 : index
    %59 = memref.load %arg2[%c1_31, %c3_32] : memref<2x4xf32, #tpu.memory_space<smem>>
    %60 = vector.broadcast %59 : f32 to vector<16x16xf32>
    %61 = arith.mulf %7, %60 : vector<16x16xf32>
    %62 = arith.addf %58, %61 : vector<16x16xf32>
    %c1_33 = arith.constant 1 : index
    %63 = memref.load %arg3[%c1_33] : memref<2xf32, #tpu.memory_space<smem>>
    %64 = vector.broadcast %63 : f32 to vector<16x16xf32>
    %65 = arith.addf %62, %64 : vector<16x16xf32>
    %cst_34 = arith.constant dense<0.000000e+00> : vector<16x64xf32>
    %66 = tpu.matmul %65, %25, %cst_34 {dimension_numbers = #tpu.dot_dimension_numbers<[1], [0], [0], [1], [0, 0, 1, 1], [], []>, precision = #tpu.contract_precision<fp32>} : vector<16x16xf32>, vector<16x64xf32>, vector<16x64xf32> -> vector<16x64xf32>
    %c0_35 = arith.constant 0 : index
    %c1_36 = arith.constant 1 : index
    %c0_37 = arith.constant 0 : index
    %c0_38 = arith.constant 0 : index
    %67 = vector.load %arg5[%c0_35, %c1_36, %c0_37, %c0_38] : memref<1x2x16x64xf32, #tpu.memory_space<vmem>>, vector<1x1x16x64xf32>
    %68 = vector.shape_cast %67 : vector<1x1x16x64xf32> to vector<16x64xf32>
    %69 = vector.shape_cast %66 : vector<16x64xf32> to vector<1x1x16x64xf32>
    tpu.vector_store %arg5[%c0_35, %c1_36, %c0_37, %c0_38], %69 {strides = array<i32>} : memref<1x2x16x64xf32, #tpu.memory_space<vmem>>, vector<1x1x16x64xf32>,
    return
  }
  func.func @transform_0(%arg0: i32, %arg1: i32) -> (i32, i32) {
    %c0_i32 = arith.constant 0 : i32
    %c0_i32_0 = arith.constant 0 : i32
    %c0_i32_1 = arith.constant 0 : i32
    return %c0_i32, %c0_i32_0 : i32, i32
  }
  func.func @transform_1(%arg0: i32, %arg1: i32) -> i32 {
    %c0_i32 = arith.constant 0 : i32
    %c0_i32_0 = arith.constant 0 : i32
    return %c0_i32 : i32
  }
  func.func @transform_2(%arg0: i32, %arg1: i32) -> (i32, i32, i32, i32) {
    %c0_i32 = arith.constant 0 : i32
    %c0_i32_0 = arith.constant 0 : i32
    %c0_i32_1 = arith.constant 0 : i32
    return %arg0, %c0_i32, %arg1, %c0_i32_0 : i32, i32, i32, i32
  }
  func.func @transform_3(%arg0: i32, %arg1: i32) -> (i32, i32, i32, i32) {
    %c0_i32 = arith.constant 0 : i32
    %c0_i32_0 = arith.constant 0 : i32
    %c0_i32_1 = arith.constant 0 : i32
    return %arg0, %c0_i32, %arg1, %c0_i32_0 : i32, i32, i32, i32
  }
}

</mosaic_0001>

<llo_original>
// kernel: upsample_forward.1
$region0: #{upsample_forward.1}
  #allocation0 [shape = 'u32[]', space=smem, size = 0x4, offset = 0x4, fixed_abs, tag = 'smem constant byte address 0x4 - core index']
  #allocation1 [shape = 'u32[144,128]{1,0:T(1,128)}', space=vmem, size = 0x12000, scoped, tag = 'internal scratch']
  %s0 = inlined_call_operand.vmem [shape: f32[2,4], index: 0, kind: input, shape index: {}]
  %s1 = inlined_call_operand.vmem [shape: f32[2], index: 1, kind: input, shape index: {}]
  %s2 = inlined_call_operand.hbm [shape: f32[2,4,16,16], index: 2, kind: input, shape index: {}]
  %s3 = inlined_call_operand.vmem [shape: f32[2,2,16,64], index: 3, kind: output, shape index: {}]
  %s4 = sld [smem:[#allocation0]]
  $region57: #{upsample_forward.1} parent=0
    _
  %s6 = ssub.s32 1, %s4
  %s7 = scalar_select 0, %s6, %s4
  $region1: #{upsample_forward.1} parent=0
    #allocation2 [shape = 'u8[1024]{0}', space=smem, size = 0x400, scoped, tag = 'input window, operand 0, single buffered']
    #allocation3 [shape = 's32[2]{0}', space=sflag, size = 0x8, scoped, tag = 'scoped memory for upsample_forward.1']
    #allocation4 [shape = 's32[2]{0}', space=sflag, size = 0x8, scoped, tag = 'scoped memory for upsample_forward.1']
    #allocation5 [shape = 'u8[512]{0}', space=smem, size = 0x200, scoped, tag = 'input window, operand 1, single buffered']
    #allocation6 [shape = 's32[1]{0}', space=sflag, size = 0x4, scoped, tag = 'scoped memory for upsample_forward.1']
    #allocation7 [shape = 'u8[65536]{0}', space=vmem, size = 0x10000, scoped, tag = 'input window, operand 2']
    %8 = vsyncpa [#allocation4], 0
    %9 = vsyncpa [#allocation6], 0
    %10 = vsyncpa [#allocation3], 0
    %s11 = scalar_lea.sflag [#allocation3], 1
    %12 = vsyncpa %s11, 0
    loop: start=0, step=1, limit=4
    $region2: #{upsample_forward.1} parent=1 // loop_pre_header
      _
    $region3: #{upsample_forward.1} parent=1 // loop_header
      %s14 = sphi 0, %s18
      %p15 = scmp.ge.s32.totalorder %s14, 4
      %s21 = sphi 0, %s33
      %s22 = sphi 0, %s29
      %s23 = sphi 0, %s21
      %s24 = sphi 0, %s22
      %s25 = sphi 0, %s23
      %s26 = sphi 0, %s24
      %s34 = sphi 0, %s34
      %s36 = sphi 0, %s34
      %s37 = sphi 0, %s36
      %s51 = sphi 0, %s37
      %s55 = sphi 0, %s55
      %s57 = sphi 0, %s55
      %s58 = sphi 0, %s57
      %s72 = sphi 0, %s58
      %s80 = sphi 0, %s82
      %s83 = sphi 0, %s80
      %s84 = sphi 0, %s83
      %s100 = sphi 0, %s84
      %s108 = sphi 0, %s110
      %s111 = sphi 0, %s108
      %s112 = sphi 0, %s111
      %s128 = sphi 0, %s112
    $region4: #{upsample_forward.1} parent=1 // loop_header_branch
      %17 = sbr.rel (%p15) target = $region8
    $region5: #{upsample_forward.1} parent=1 // loop_body
      %s19 = ssub.s32 %s14, 1
      %s20 = ssub.s32 %s14, 2
      %s27 = sadd.s32 1, %s22
      %p28 = scmp.ge.s32.totalorder %s27, 1
      %s29 = scalar_select %p28, 0, %s27
      %s30 = sadd.s32 1, %s21
      %s31 = scalar_select %p28, %s30, %s21
      %p32 = scmp.ge.s32.totalorder %s31, 2
      %s33 = scalar_select %p32, 0, %s31
      %s35 = sadd.s32 %s34, 1
      %p38 = scmp.eq.s32.totalorder %s14, 1
      %p39 = scmp.ne.s32.totalorder %s34, %s36
      %p40 = scmp.eq.s32.totalorder %s14, 0
      %p41 = por %p39, %p40
      %p42 = scmp.ne.s32.totalorder %s34, %s36
      %p43 = scmp.eq.s32.totalorder %s19, 1
      %p44 = por %p42, %p43
      %p45 = scmp.ne.s32.totalorder %s36, %s37
      %p46 = scmp.eq.s32.totalorder %s19, 0
      %p47 = por %p45, %p46
      %p48 = scmp.ne.s32.totalorder %s36, %s37
      %p49 = scmp.eq.s32.totalorder %s20, 1
      %p50 = por %p48, %p49
      %p52 = scmp.ne.s32.totalorder %s37, %s51
      %p53 = scmp.eq.s32.totalorder %s20, 0
      %p54 = por %p52, %p53
      %s56 = sadd.s32 %s55, 1
      %p59 = scmp.eq.s32.totalorder %s14, 1
      %p60 = scmp.ne.s32.totalorder %s55, %s57
      %p61 = scmp.eq.s32.totalorder %s14, 0
      %p62 = por %p60, %p61
      %p63 = scmp.ne.s32.totalorder %s55, %s57
      %p64 = scmp.eq.s32.totalorder %s19, 1
      %p65 = por %p63, %p64
      %p66 = scmp.ne.s32.totalorder %s57, %s58
      %p67 = scmp.eq.s32.totalorder %s19, 0
      %p68 = por %p66, %p67
      %p69 = scmp.ne.s32.totalorder %s57, %s58
      %p70 = scmp.eq.s32.totalorder %s20, 1
      %p71 = por %p69, %p70
      %p73 = scmp.ne.s32.totalorder %s58, %s72
      %p74 = scmp.eq.s32.totalorder %s20, 0
      %p75 = por %p73, %p74
      %s76 = ssub.s32 %s21, %s33
      %s77 = ssub.s32 %s22, %s29
      %s78 = sor.u32 %s76, %s77
      %p79 = scmp.eq.s32.totalorder %s78, 0
      %s81 = sadd.s32 %s80, 1
      %s82 = scalar_select %p79, %s80, %s81
      %p85 = pneg %p79
      %p86 = scmp.eq.s32.totalorder %s14, 1
      %p87 = por %p85, %p86
      %p88 = scmp.ne.s32.totalorder %s80, %s83
      %p89 = scmp.eq.s32.totalorder %s14, 0
      %p90 = por %p88, %p89
      %p91 = scmp.ne.s32.totalorder %s80, %s83
      %p92 = scmp.eq.s32.totalorder %s19, 1
      %p93 = por %p91, %p92
      %p94 = scmp.ne.s32.totalorder %s83, %s84
      %p95 = scmp.eq.s32.totalorder %s19, 0
      %p96 = por %p94, %p95
      %p97 = scmp.ne.s32.totalorder %s83, %s84
      %p98 = scmp.eq.s32.totalorder %s20, 1
      %p99 = por %p97, %p98
      %p101 = scmp.ne.s32.totalorder %s84, %s100
      %p102 = scmp.eq.s32.totalorder %s20, 0
      %p103 = por %p101, %p102
      %s104 = ssub.s32 %s21, %s33
      %s105 = ssub.s32 %s22, %s29
      %s106 = sor.u32 %s104, %s105
      %p107 = scmp.eq.s32.totalorder %s106, 0
      %s109 = sadd.s32 %s108, 1
      %s110 = scalar_select %p107, %s108, %s109
      %p113 = pneg %p107
      %p114 = scmp.eq.s32.totalorder %s14, 1
      %p115 = por %p113, %p114
      %p116 = scmp.ne.s32.totalorder %s108, %s111
      %p117 = scmp.eq.s32.totalorder %s14, 0
      %p118 = por %p116, %p117
      %p119 = scmp.ne.s32.totalorder %s108, %s111
      %p120 = scmp.eq.s32.totalorder %s19, 1
      %p121 = por %p119, %p120
      %p122 = scmp.ne.s32.totalorder %s111, %s112
      %p123 = scmp.eq.s32.totalorder %s19, 0
      %p124 = por %p122, %p123
      %p125 = scmp.ne.s32.totalorder %s111, %s112
      %p126 = scmp.eq.s32.totalorder %s20, 1
      %p127 = por %p125, %p126
      %p129 = scmp.ne.s32.totalorder %s112, %s128
      %p130 = scmp.eq.s32.totalorder %s20, 0
      %p131 = por %p129, %p130
      %p132 = scmp.le.s32.totalorder 1, %s14
      %p133 = scmp.lt.s32.totalorder %s14, 3
      %p134 = pnand %p132, %p133
      %p135 = pneg %p134
      // Predicated region
      $region9: #{upsample_forward.1} parent=5 // pred_check
        _
      $region10: #{upsample_forward.1} parent=5 // pred_check_branch
        %137 = sbr.rel (%p134) target = $region12
      $region11: #{upsample_forward.1} parent=5 // pred_region
        %s138 = ssub.s32 %s14, 1
        // Predicated region
        $region13: #{upsample_forward.1} parent=11 // pred_check
          %p139 = pneg %p47
        $region14: #{upsample_forward.1} parent=11 // pred_check_branch
          %141 = sbr.rel (%p139) target = $region16
        $region15: #{upsample_forward.1} parent=11 // pred_region
          %s143 = ssub.s32 32, 32
          %144 = vsyncadd [#allocation4], %s143
          %s146 = sshll.u32 %s0, 4
          %s147 = int_to_ptr.vmem [resolvable:$true] %s146
          %149 = dma.vmem_to_smem %s147, 32, [#allocation2], [#allocation4]
        $region16: #{upsample_forward.1} parent=11 // pred_fallthru
          _
        // Predicated region
        $region17: #{upsample_forward.1} parent=11 // pred_check
          %p150 = pneg %p68
        $region18: #{upsample_forward.1} parent=11 // pred_check_branch
          %152 = sbr.rel (%p150) target = $region20
        $region19: #{upsample_forward.1} parent=11 // pred_region
          %s154 = ssub.s32 16, 16
          %155 = vsyncadd [#allocation6], %s154
          %s157 = sshll.u32 %s1, 4
          %s158 = int_to_ptr.vmem [resolvable:$true] %s157
          %160 = dma.vmem_to_smem %s158, 16, [#allocation5], [#allocation6]
        $region20: #{upsample_forward.1} parent=11 // pred_fallthru
          _
      $region12: #{upsample_forward.1} parent=5 // pred_fallthru
        _
      %p161 = scmp.lt.s32.totalorder %s14, 2
      // Predicated region
      $region21: #{upsample_forward.1} parent=5 // pred_check
        %p162 = pneg %p161
      $region22: #{upsample_forward.1} parent=5 // pred_check_branch
        %164 = sbr.rel (%p162) target = $region24
      $region23: #{upsample_forward.1} parent=5 // pred_region
        // Predicated region
        $region25: #{upsample_forward.1} parent=23 // pred_check
          %p165 = pneg %p90
        $region26: #{upsample_forward.1} parent=23 // pred_check_branch
          %167 = sbr.rel (%p165) target = $region28
        $region27: #{upsample_forward.1} parent=23 // pred_region
          %s168 = sand.u32 %s80, 1
          %s169 = scalar_lea.sflag [#allocation3], %s168
          %s170 = sand.u32 %s80, 1
          %s171 = smul.addr %s170, 64
          %s172 = scalar_lea.vmem [#allocation7], %s171
          %s173 = smul.u32 2, %s22
          %s175 = ssub.s32 1024, 1024
          %176 = vsyncadd %s169, %s175
          %s177 = smul.addr %s21, 8
          %s178 = sadd.s32 %s173, %s177
          %s179 = smul.addr %s178, 128
          %s180 = scalar_lea.hbm %s2, %s179
          %s181 = sshll.u32 %s172, 4
          %s182 = int_to_ptr.vmem [resolvable:$true] %s181
          %187 = dma.hbm_to_vmem [thread:$0]  %s180, 1024, %s182, %s169, 128, 128, 8
        $region28: #{upsample_forward.1} parent=23 // pred_fallthru
          _
      $region24: #{upsample_forward.1} parent=5 // pred_fallthru
        _
      %p188 = scmp.le.s32.totalorder 1, %s14
      %p189 = scmp.lt.s32.totalorder %s14, 3
      %p190 = pnand %p188, %p189
      %p191 = pneg %p190
      // Predicated region
      $region29: #{upsample_forward.1} parent=5 // pred_check
        _
      $region30: #{upsample_forward.1} parent=5 // pred_check_branch
        %193 = sbr.rel (%p190) target = $region32
      $region31: #{upsample_forward.1} parent=5 // pred_region
        %s194 = ssub.s32 %s14, 1
        // Predicated region
        $region33: #{upsample_forward.1} parent=31 // pred_check
          %p195 = pneg %p47
        $region34: #{upsample_forward.1} parent=31 // pred_check_branch
          %197 = sbr.rel (%p195) target = $region36
        $region35: #{upsample_forward.1} parent=31 // pred_region
          %198 = dma.done [#allocation4], 32
        $region36: #{upsample_forward.1} parent=31 // pred_fallthru
          _
        // Predicated region
        $region37: #{upsample_forward.1} parent=31 // pred_check
          %p199 = pneg %p68
        $region38: #{upsample_forward.1} parent=31 // pred_check_branch
          %201 = sbr.rel (%p199) target = $region40
        $region39: #{upsample_forward.1} parent=31 // pred_region
          %202 = dma.done [#allocation6], 16
        $region40: #{upsample_forward.1} parent=31 // pred_fallthru
          _
        %s203 = sand.u32 %s83, 1
        %s204 = scalar_lea.sflag [#allocation3], %s203
        %s205 = sand.u32 %s83, 1
        %s206 = smul.addr %s205, 64
        %s207 = scalar_lea.vmem [#allocation7], %s206
        // Predicated region
        $region41: #{upsample_forward.1} parent=31 // pred_check
          %p208 = pneg %p96
        $region42: #{upsample_forward.1} parent=31 // pred_check_branch
          %210 = sbr.rel (%p208) target = $region44
        $region43: #{upsample_forward.1} parent=31 // pred_region
          %211 = dma.done %s204, 1024
        $region44: #{upsample_forward.1} parent=31 // pred_fallthru
          _
        %212 = sfence
        %p213 = pneg %p47
        %p214 = pneg %p44
        %p215 = pneg %p68
        %p216 = pneg %p65
        %s217 = sand.u32 %s83, 1
        %s218 = scalar_lea.sflag [#allocation3], %s217
        %s219 = sand.u32 %s83, 1
        %s220 = smul.addr %s219, 64
        %s221 = scalar_lea.vmem [#allocation7], %s220
        %p222 = pneg %p96
        %p223 = pneg %p93
        %p224 = pneg %p124
        %p225 = pneg %p121
        %s226 = smul.u32 2, %s24
        %p227 = scmp.lt.s32.totalorder %s23, 1
        %s228 = scalar_select %p227, %s23, 1
        %p229 = scmp.lt.s32.totalorder %s226, 1
        %s230 = scalar_select %p229, %s226, 1
        %s231 = smul.addr %s228, 4
        %s232 = sadd.s32 %s230, %s231
        %s233 = smul.addr %s232, 8
        %s234 = scalar_lea.vmem %s3, %s233
        %s235 = smul.u32 2, %s24
        %s236 = smul.u32 2, %s24
        %p237 = scmp.lt.s32.totalorder %s23, 1
        %s238 = scalar_select %p237, %s23, 1
        %p239 = scmp.lt.s32.totalorder %s236, 1
        %s240 = scalar_select %p239, %s236, 1
        %s241 = smul.addr %s238, 4
        %s242 = sadd.s32 %s240, %s241
        %s243 = smul.addr %s242, 8
        %s244 = scalar_lea.vmem %s3, %s243
        %s245 = smul.u32 2, %s24
        %v246 = vld [vmem:[%s207] sm:$0xff]
        %v247 = vld [vmem:[%s207 + $0x8] sm:$0xff]
        %s248 = scalar_lea.vmem %s207, 16 [#allocation7]
        %v249 = vld [vmem:[%s248] sm:$0xff]
        %v250 = vld [vmem:[%s248 + $0x8] sm:$0xff]
        %s251 = scalar_lea.vmem %s207, 32 [#allocation7]
        %v252 = vld [vmem:[%s251] sm:$0xff]
        %v253 = vld [vmem:[%s251 + $0x8] sm:$0xff]
        %s254 = scalar_lea.vmem %s207, 48 [#allocation7]
        %v255 = vld [vmem:[%s254] sm:$0xff]
        %v256 = vld [vmem:[%s254 + $0x8] sm:$0xff]
        %v257 = vlaneseq
        %v258 = vand.u32 %v257, 127
        %v259 = vlaneseq
        %v260 = vshrl.u32 %v259, 7
        %v261 = vadd.s32 %v260, 8
        %v262 = vmul.u32 %v260, 2
        %v263 = vmul.u32 %v261, 2
        %v264 = vsub.s32 %v258, %v262
        %v265 = vsub.s32 %v258, %v263
        %vm266 = vcmp.eq.s32.totalorder %v264, 0
        %vm267 = vcmp.eq.s32.totalorder %v265, 0
        %vm268 = vcmp.eq.s32.totalorder %v264, 1
        %vm269 = vcmp.eq.s32.totalorder %v265, 1
        %vm270 = vmor %vm266, %vm268
        %vm271 = vmor %vm267, %vm269
        %vm272 = vcmp.eq.s32.totalorder %v264, 32
        %vm273 = vcmp.eq.s32.totalorder %v265, 32
        %vm274 = vmor %vm270, %vm272
        %vm275 = vmor %vm271, %vm273
        %vm276 = vcmp.eq.s32.totalorder %v264, 33
        %vm277 = vcmp.eq.s32.totalorder %v265, 33
        %vm278 = vmor %vm274, %vm276
        %vm279 = vmor %vm275, %vm277
        %v280 = vsel %vm278, 1, 0
        %v281 = vsel %vm279, 1, 0
        %v282 = vcvt.s32.f32 %v280
        %v283 = vcvt.s32.f32 %v281
        %s284 = sld [smem:[#allocation2]]
        %v285 = vstv %s284
        %v286 = vmul.f32 %v246, %v285
        %v287 = vmul.f32 %v247, %v285
        %s288 = sld [smem:[#allocation2 + $0x1]]
        %v289 = vstv %s288
        %v290 = vmul.f32 %v249, %v289
        %v291 = vmul.f32 %v250, %v289
        %v292 = vadd.f32 %v286, %v290
        %v293 = vadd.f32 %v287, %v291
        %s294 = sld [smem:[#allocation2 + $0x2]]
        %v295 = vstv %s294
        %v296 = vmul.f32 %v252, %v295
        %v297 = vmul.f32 %v253, %v295
        %v298 = vadd.f32 %v292, %v296
        %v299 = vadd.f32 %v293, %v297
        %s300 = sld [smem:[#allocation2 + $0x3]]
        %v301 = vstv %s300
        %v302 = vmul.f32 %v255, %v301
        %v303 = vmul.f32 %v256, %v301
        %v304 = vadd.f32 %v298, %v302
        %v305 = vadd.f32 %v299, %v303
        %s306 = sld [smem:[#allocation5]]
        %v307 = vstv %s306
        %v308 = vadd.f32 %v304, %v307
        %v309 = vadd.f32 %v305, %v307
        %vm310 = vcmask 130048
        %v312 = vsel %vm310, %v308, 0
        %v315 = vsel %vm310, %v309, 0
        %317 = vmatprep.subr.mxu0 0.0
        %v318 = vand.u32 %v282, 4294901760
        %319 = vmatpush1.msra.mxu0 %v318
        %320 = vmatprep.subr.mxu0 0.0
        %v321 = vand.u32 %v283, 4294901760
        %322 = vmatpush1.msra.mxu0 %v321
        %323 = vmatprep.subr.mxu0 0.0
        %324 = vmatpush1.msra.mxu0 0.0
        %325 = vmatprep.subr.mxu0 0.0
        %326 = vmatpush1.msra.mxu0 0.0
        %327 = vmatprep.subr.mxu0 0.0
        %328 = vmatpush1.msra.mxu0 0.0
        %329 = vmatprep.subr.mxu0 0.0
        %330 = vmatpush1.msra.mxu0 0.0
        %331 = vmatprep.subr.mxu0 0.0
        %332 = vmatpush1.msra.mxu0 0.0
        %333 = vmatprep.subr.mxu0 0.0
        %334 = vmatpush1.msra.mxu0 0.0
        %335 = vmatprep.subr.mxu0 0.0
        %336 = vmatpush1.msra.mxu0 0.0
        %337 = vmatprep.subr.mxu0 0.0
        %338 = vmatpush1.msra.mxu0 0.0
        %339 = vmatprep.subr.mxu0 0.0
        %340 = vmatpush1.msra.mxu0 0.0
        %341 = vmatprep.subr.mxu0 0.0
        %342 = vmatpush1.msra.mxu0 0.0
        %343 = vmatprep.subr.mxu0 0.0
        %344 = vmatpush1.msra.mxu0 0.0
        %345 = vmatprep.subr.mxu0 0.0
        %346 = vmatpush1.msra.mxu0 0.0
        %347 = vmatprep.subr.mxu0 0.0
        %348 = vmatpush1.msra.mxu0 0.0
        %349 = vmatprep.subr.mxu0 0.0
        %350 = vmatpush1.msra.mxu0 0.0
        %351 = vmatprep.subr.mxu0 0.0
        %352 = vmatpush1.msra.mxu0 0.0
        %353 = vmatprep.subr.mxu0 0.0
        %354 = vmatpush1.msra.mxu0 0.0
        %355 = vmatprep.subr.mxu0 0.0
        %356 = vmatpush1.msra.mxu0 0.0
        %357 = vmatprep.subr.mxu0 0.0
        %358 = vmatpush1.msra.mxu0 0.0
        %359 = vmatprep.subr.mxu0 0.0
        %360 = vmatpush1.msra.mxu0 0.0
        %361 = vmatprep.subr.mxu0 0.0
        %362 = vmatpush1.msra.mxu0 0.0
        %363 = vmatprep.subr.mxu0 0.0
        %364 = vmatpush1.msra.mxu0 0.0
        %365 = vmatprep.subr.mxu0 0.0
        %366 = vmatpush1.msra.mxu0 0.0
        %367 = vmatprep.subr.mxu0 0.0
        %368 = vmatpush1.msra.mxu0 0.0
        %369 = vmatprep.subr.mxu0 0.0
        %370 = vmatpush1.msra.mxu0 0.0
        %371 = vmatprep.subr.mxu0 0.0
        %372 = vmatpush1.msra.mxu0 0.0
        %373 = vmatprep.subr.mxu0 0.0
        %374 = vmatpush1.msra.mxu0 0.0
        %375 = vmatprep.subr.mxu0 0.0
        %376 = vmatpush1.msra.mxu0 0.0
        %377 = vmatprep.subr.mxu0 0.0
        %378 = vmatpush1.msra.mxu0 0.0
        %379 = vmatprep.subr.mxu0 0.0
        %380 = vmatpush1.msra.mxu0 0.0
        %381 = vmatprep.subr.mxu0 0.0
        %382 = vmatpush1.msra.mxu0 0.0
        %383 = vmatprep.mubr.f32.mxu0 0.0
        %v384 = vand.u32 %v312, 4294901760
        %v385 = vsub.f32 %v312, %v384
        %v386 = vand.u32 %v385, 4294901760
        %v387 = vsub.f32 %v385, %v386
        %v388 = vand.u32 %v387, 4294901760
        %389 = vmatmul.mubr.f32.gmra.mrb[0].mxu0 %v388
        %v390 = vpop.f32.mrb[0].mxu0
        %v391 = vadd.f32 0.0, %v390
        %v392 = vpop.f32.mrb[0].mxu0
        %393 = vmatprep.mubr.f32.mxu0 0.0
        %v394 = vand.u32 %v315, 4294901760
        %v395 = vsub.f32 %v315, %v394
        %v396 = vand.u32 %v395, 4294901760
        %v397 = vsub.f32 %v395, %v396
        %v398 = vand.u32 %v397, 4294901760
        %399 = vmatmul.mubr.f32.gmra.mrb[0].mxu0 %v398
        %v400 = vpop.f32.mrb[0].mxu0
        %v401 = vadd.f32 0.0, %v400
        %v402 = vpop.f32.mrb[0].mxu0
        %403 = vdwg.mxu0
        %404 = vmatprep.subr.mxu0 0.0
        %v405 = vand.u32 %v282, 4294901760
        %v406 = vsub.f32 %v282, %v405
        %v407 = vand.u32 %v406, 4294901760
        %v408 = vsub.f32 %v406, %v407
        %v409 = vand.u32 %v408, 4294901760
        %410 = vmatpush1.msra.mxu0 %v409
        %411 = vmatprep.subr.mxu0 0.0
        %v412 = vand.u32 %v283, 4294901760
        %v413 = vsub.f32 %v283, %v412
        %v414 = vand.u32 %v413, 4294901760
        %v415 = vsub.f32 %v413, %v414
        %v416 = vand.u32 %v415, 4294901760
        %417 = vmatpush1.msra.mxu0 %v416
        %418 = vmatprep.subr.mxu0 0.0
        %419 = vmatpush1.msra.mxu0 0.0
        %420 = vmatprep.subr.mxu0 0.0
        %421 = vmatpush1.msra.mxu0 0.0
        %422 = vmatprep.subr.mxu0 0.0
        %423 = vmatpush1.msra.mxu0 0.0
        %424 = vmatprep.subr.mxu0 0.0
        %425 = vmatpush1.msra.mxu0 0.0
        %426 = vmatprep.subr.mxu0 0.0
        %427 = vmatpush1.msra.mxu0 0.0
        %428 = vmatprep.subr.mxu0 0.0
        %429 = vmatpush1.msra.mxu0 0.0
        %430 = vmatprep.subr.mxu0 0.0
        %431 = vmatpush1.msra.mxu0 0.0
        %432 = vmatprep.subr.mxu0 0.0
        %433 = vmatpush1.msra.mxu0 0.0
        %434 = vmatprep.subr.mxu0 0.0
        %435 = vmatpush1.msra.mxu0 0.0
        %436 = vmatprep.subr.mxu0 0.0
        %437 = vmatpush1.msra.mxu0 0.0
        %438 = vmatprep.subr.mxu0 0.0
        %439 = vmatpush1.msra.mxu0 0.0
        %440 = vmatprep.subr.mxu0 0.0
        %441 = vmatpush1.msra.mxu0 0.0
        %442 = vmatprep.subr.mxu0 0.0
        %443 = vmatpush1.msra.mxu0 0.0
        %444 = vmatprep.subr.mxu0 0.0
        %445 = vmatpush1.msra.mxu0 0.0
        %446 = vmatprep.subr.mxu0 0.0
        %447 = vmatpush1.msra.mxu0 0.0
        %448 = vmatprep.subr.mxu0 0.0
        %449 = vmatpush1.msra.mxu0 0.0
        %450 = vmatprep.subr.mxu0 0.0
        %451 = vmatpush1.msra.mxu0 0.0
        %452 = vmatprep.subr.mxu0 0.0
        %453 = vmatpush1.msra.mxu0 0.0
        %454 = vmatprep.subr.mxu0 0.0
        %455 = vmatpush1.msra.mxu0 0.0
        %456 = vmatprep.subr.mxu0 0.0
        %457 = vmatpush1.msra.mxu0 0.0
        %458 = vmatprep.subr.mxu0 0.0
        %459 = vmatpush1.msra.mxu0 0.0
        %460 = vmatprep.subr.mxu0 0.0
        %461 = vmatpush1.msra.mxu0 0.0
        %462 = vmatprep.subr.mxu0 0.0
        %463 = vmatpush1.msra.mxu0 0.0
        %464 = vmatprep.subr.mxu0 0.0
        %465 = vmatpush1.msra.mxu0 0.0
        %466 = vmatprep.subr.mxu0 0.0
        %467 = vmatpush1.msra.mxu0 0.0
        %468 = vmatprep.subr.mxu0 0.0
        %469 = vmatpush1.msra.mxu0 0.0
        %470 = vmatprep.subr.mxu0 0.0
        %471 = vmatpush1.msra.mxu0 0.0
        %472 = vmatprep.subr.mxu0 0.0
        %473 = vmatpush1.msra.mxu0 0.0
        %474 = vmatprep.subr.mxu0 0.0
        %475 = vmatpush1.msra.mxu0 0.0
        %476 = vmatprep.subr.mxu0 0.0
        %477 = vmatpush1.msra.mxu0 0.0
        %478 = vmatprep.mubr.f32.mxu0 0.0
        %v479 = vand.u32 %v312, 4294901760
        %480 = vmatmul.mubr.f32.gmra.mrb[0].mxu0 %v479
        %v481 = vpop.f32.mrb[0].mxu0
        %v482 = vadd.f32 %v391, %v481
        %v483 = vpop.f32.mrb[0].mxu0
        %484 = vmatprep.mubr.f32.mxu0 0.0
        %v485 = vand.u32 %v315, 4294901760
        %486 = vmatmul.mubr.f32.gmra.mrb[0].mxu0 %v485
        %v487 = vpop.f32.mrb[0].mxu0
        %v488 = vadd.f32 %v401, %v487
        %v489 = vpop.f32.mrb[0].mxu0
        %490 = vdwg.mxu0
        %491 = vmatprep.subr.mxu0 0.0
        %v492 = vand.u32 %v282, 4294901760
        %v493 = vsub.f32 %v282, %v492
        %494 = vmatpush1.msra.mxu0 %v493
        %495 = vmatprep.subr.mxu0 0.0
        %v496 = vand.u32 %v283, 4294901760
        %v497 = vsub.f32 %v283, %v496
        %498 = vmatpush1.msra.mxu0 %v497
        %499 = vmatprep.subr.mxu0 0.0
        %500 = vmatpush1.msra.mxu0 0.0
        %501 = vmatprep.subr.mxu0 0.0
        %502 = vmatpush1.msra.mxu0 0.0
        %503 = vmatprep.subr.mxu0 0.0
        %504 = vmatpush1.msra.mxu0 0.0
        %505 = vmatprep.subr.mxu0 0.0
        %506 = vmatpush1.msra.mxu0 0.0
        %507 = vmatprep.subr.mxu0 0.0
        %508 = vmatpush1.msra.mxu0 0.0
        %509 = vmatprep.subr.mxu0 0.0
        %510 = vmatpush1.msra.mxu0 0.0
        %511 = vmatprep.subr.mxu0 0.0
        %512 = vmatpush1.msra.mxu0 0.0
        %513 = vmatprep.subr.mxu0 0.0
        %514 = vmatpush1.msra.mxu0 0.0
        %515 = vmatprep.subr.mxu0 0.0
        %516 = vmatpush1.msra.mxu0 0.0
        %517 = vmatprep.subr.mxu0 0.0
        %518 = vmatpush1.msra.mxu0 0.0
        %519 = vmatprep.subr.mxu0 0.0
        %520 = vmatpush1.msra.mxu0 0.0
        %521 = vmatprep.subr.mxu0 0.0
        %522 = vmatpush1.msra.mxu0 0.0
        %523 = vmatprep.subr.mxu0 0.0
        %524 = vmatpush1.msra.mxu0 0.0
        %525 = vmatprep.subr.mxu0 0.0
        %526 = vmatpush1.msra.mxu0 0.0
        %527 = vmatprep.subr.mxu0 0.0
        %528 = vmatpush1.msra.mxu0 0.0
        %529 = vmatprep.subr.mxu0 0.0
        %530 = vmatpush1.msra.mxu0 0.0
        %531 = vmatprep.subr.mxu0 0.0
        %532 = vmatpush1.msra.mxu0 0.0
        %533 = vmatprep.subr.mxu0 0.0
        %534 = vmatpush1.msra.mxu0 0.0
        %535 = vmatprep.subr.mxu0 0.0
        %536 = vmatpush1.msra.mxu0 0.0
        %537 = vmatprep.subr.mxu0 0.0
        %538 = vmatpush1.msra.mxu0 0.0
        %539 = vmatprep.subr.mxu0 0.0
        %540 = vmatpush1.msra.mxu0 0.0
        %541 = vmatprep.subr.mxu0 0.0
        %542 = vmatpush1.msra.mxu0 0.0
        %543 = vmatprep.subr.mxu0 0.0
        %544 = vmatpush1.msra.mxu0 0.0
        %545 = vmatprep.subr.mxu0 0.0
        %546 = vmatpush1.msra.mxu0 0.0
        %547 = vmatprep.subr.mxu0 0.0
        %548 = vmatpush1.msra.mxu0 0.0
        %549 = vmatprep.subr.mxu0 0.0
        %550 = vmatpush1.msra.mxu0 0.0
        %551 = vmatprep.subr.mxu0 0.0
        %552 = vmatpush1.msra.mxu0 0.0
        %553 = vmatprep.subr.mxu0 0.0
        %554 = vmatpush1.msra.mxu0 0.0
        %555 = vmatprep.subr.mxu0 0.0
        %556 = vmatpush1.msra.mxu0 0.0
        %557 = vmatprep.subr.mxu0 0.0
        %558 = vmatpush1.msra.mxu0 0.0
        %559 = vmatprep.mubr.f32.mxu0 0.0
        %v560 = vand.u32 %v312, 4294901760
        %v561 = vsub.f32 %v312, %v560
        %562 = vmatmul.mubr.f32.gmra.mrb[0].mxu0 %v561
        %v563 = vpop.f32.mrb[0].mxu0
        %v564 = vadd.f32 %v482, %v563
        %v565 = vpop.f32.mrb[0].mxu0
        %566 = vmatprep.mubr.f32.mxu0 0.0
        %v567 = vand.u32 %v315, 4294901760
        %v568 = vsub.f32 %v315, %v567
        %569 = vmatmul.mubr.f32.gmra.mrb[0].mxu0 %v568
        %v570 = vpop.f32.mrb[0].mxu0
        %v571 = vadd.f32 %v488, %v570
        %v572 = vpop.f32.mrb[0].mxu0
        %573 = vdwg.mxu0
        %574 = vmatprep.subr.mxu0 0.0
        %v575 = vand.u32 %v282, 4294901760
        %576 = vmatpush1.msra.mxu0 %v575
        %577 = vmatprep.subr.mxu0 0.0
        %v578 = vand.u32 %v283, 4294901760
        %579 = vmatpush1.msra.mxu0 %v578
        %580 = vmatprep.subr.mxu0 0.0
        %581 = vmatpush1.msra.mxu0 0.0
        %582 = vmatprep.subr.mxu0 0.0
        %583 = vmatpush1.msra.mxu0 0.0
        %584 = vmatprep.subr.mxu0 0.0
        %585 = vmatpush1.msra.mxu0 0.0
        %586 = vmatprep.subr.mxu0 0.0
        %587 = vmatpush1.msra.mxu0 0.0
        %588 = vmatprep.subr.mxu0 0.0
        %589 = vmatpush1.msra.mxu0 0.0
        %590 = vmatprep.subr.mxu0 0.0
        %591 = vmatpush1.msra.mxu0 0.0
        %592 = vmatprep.subr.mxu0 0.0
        %593 = vmatpush1.msra.mxu0 0.0
        %594 = vmatprep.subr.mxu0 0.0
        %595 = vmatpush1.msra.mxu0 0.0
        %596 = vmatprep.subr.mxu0 0.0
        %597 = vmatpush1.msra.mxu0 0.0
        %598 = vmatprep.subr.mxu0 0.0
        %599 = vmatpush1.msra.mxu0 0.0
        %600 = vmatprep.subr.mxu0 0.0
        %601 = vmatpush1.msra.mxu0 0.0
        %602 = vmatprep.subr.mxu0 0.0
        %603 = vmatpush1.msra.mxu0 0.0
        %604 = vmatprep.subr.mxu0 0.0
        %605 = vmatpush1.msra.mxu0 0.0
        %606 = vmatprep.subr.mxu0 0.0
        %607 = vmatpush1.msra.mxu0 0.0
        %608 = vmatprep.subr.mxu0 0.0
        %609 = vmatpush1.msra.mxu0 0.0
        %610 = vmatprep.subr.mxu0 0.0
        %611 = vmatpush1.msra.mxu0 0.0
        %612 = vmatprep.subr.mxu0 0.0
        %613 = vmatpush1.msra.mxu0 0.0
        %614 = vmatprep.subr.mxu0 0.0
        %615 = vmatpush1.msra.mxu0 0.0
        %616 = vmatprep.subr.mxu0 0.0
        %617 = vmatpush1.msra.mxu0 0.0
        %618 = vmatprep.subr.mxu0 0.0
        %619 = vmatpush1.msra.mxu0 0.0
        %620 = vmatprep.subr.mxu0 0.0
        %621 = vmatpush1.msra.mxu0 0.0
        %622 = vmatprep.subr.mxu0 0.0
        %623 = vmatpush1.msra.mxu0 0.0
        %624 = vmatprep.subr.mxu0 0.0
        %625 = vmatpush1.msra.mxu0 0.0
        %626 = vmatprep.subr.mxu0 0.0
        %627 = vmatpush1.msra.mxu0 0.0
        %628 = vmatprep.subr.mxu0 0.0
        %629 = vmatpush1.msra.mxu0 0.0
        %630 = vmatprep.subr.mxu0 0.0
        %631 = vmatpush1.msra.mxu0 0.0
        %632 = vmatprep.subr.mxu0 0.0
        %633 = vmatpush1.msra.mxu0 0.0
        %634 = vmatprep.subr.mxu0 0.0
        %635 = vmatpush1.msra.mxu0 0.0
        %636 = vmatprep.subr.mxu0 0.0
        %637 = vmatpush1.msra.mxu0 0.0
        %638 = vmatprep.subr.mxu0 0.0
        %639 = vmatpush1.msra.mxu0 0.0
        %640 = vmatprep.mubr.f32.mxu0 0.0
        %v641 = vand.u32 %v312, 4294901760
        %v642 = vsub.f32 %v312, %v641
        %v643 = vand.u32 %v642, 4294901760
        %644 = vmatmul.mubr.f32.gmra.mrb[0].mxu0 %v643
        %v645 = vpop.f32.mrb[0].mxu0
        %v646 = vadd.f32 %v564, %v645
        %v647 = vpop.f32.mrb[0].mxu0
        %648 = vmatprep.mubr.f32.mxu0 0.0
        %v649 = vand.u32 %v315, 4294901760
        %v650 = vsub.f32 %v315, %v649
        %v651 = vand.u32 %v650, 4294901760
        %652 = vmatmul.mubr.f32.gmra.mrb[0].mxu0 %v651
        %v653 = vpop.f32.mrb[0].mxu0
        %v654 = vadd.f32 %v571, %v653
        %v655 = vpop.f32.mrb[0].mxu0
        %656 = vdwg.mxu0
        %657 = vmatprep.subr.mxu0 0.0
        %v658 = vand.u32 %v282, 4294901760
        %v659 = vsub.f32 %v282, %v658
        %v660 = vand.u32 %v659, 4294901760
        %661 = vmatpush1.msra.mxu0 %v660
        %662 = vmatprep.subr.mxu0 0.0
        %v663 = vand.u32 %v283, 4294901760
        %v664 = vsub.f32 %v283, %v663
        %v665 = vand.u32 %v664, 4294901760
        %666 = vmatpush1.msra.mxu0 %v665
        %667 = vmatprep.subr.mxu0 0.0
        %668 = vmatpush1.msra.mxu0 0.0
        %669 = vmatprep.subr.mxu0 0.0
        %670 = vmatpush1.msra.mxu0 0.0
        %671 = vmatprep.subr.mxu0 0.0
        %672 = vmatpush1.msra.mxu0 0.0
        %673 = vmatprep.subr.mxu0 0.0
        %674 = vmatpush1.msra.mxu0 0.0
        %675 = vmatprep.subr.mxu0 0.0
        %676 = vmatpush1.msra.mxu0 0.0
        %677 = vmatprep.subr.mxu0 0.0
        %678 = vmatpush1.msra.mxu0 0.0
        %679 = vmatprep.subr.mxu0 0.0
        %680 = vmatpush1.msra.mxu0 0.0
        %681 = vmatprep.subr.mxu0 0.0
        %682 = vmatpush1.msra.mxu0 0.0
        %683 = vmatprep.subr.mxu0 0.0
        %684 = vmatpush1.msra.mxu0 0.0
        %685 = vmatprep.subr.mxu0 0.0
        %686 = vmatpush1.msra.mxu0 0.0
        %687 = vmatprep.subr.mxu0 0.0
        %688 = vmatpush1.msra.mxu0 0.0
        %689 = vmatprep.subr.mxu0 0.0
        %690 = vmatpush1.msra.mxu0 0.0
        %691 = vmatprep.subr.mxu0 0.0
        %692 = vmatpush1.msra.mxu0 0.0
        %693 = vmatprep.subr.mxu0 0.0
        %694 = vmatpush1.msra.mxu0 0.0
        %695 = vmatprep.subr.mxu0 0.0
        %696 = vmatpush1.msra.mxu0 0.0
        %697 = vmatprep.subr.mxu0 0.0
        %698 = vmatpush1.msra.mxu0 0.0
        %699 = vmatprep.subr.mxu0 0.0
        %700 = vmatpush1.msra.mxu0 0.0
        %701 = vmatprep.subr.mxu0 0.0
        %702 = vmatpush1.msra.mxu0 0.0
        %703 = vmatprep.subr.mxu0 0.0
        %704 = vmatpush1.msra.mxu0 0.0
        %705 = vmatprep.subr.mxu0 0.0
        %706 = vmatpush1.msra.mxu0 0.0
        %707 = vmatprep.subr.mxu0 0.0
        %708 = vmatpush1.msra.mxu0 0.0
        %709 = vmatprep.subr.mxu0 0.0
        %710 = vmatpush1.msra.mxu0 0.0
        %711 = vmatprep.subr.mxu0 0.0
        %712 = vmatpush1.msra.mxu0 0.0
        %713 = vmatprep.subr.mxu0 0.0
        %714 = vmatpush1.msra.mxu0 0.0
        %715 = vmatprep.subr.mxu0 0.0
        %716 = vmatpush1.msra.mxu0 0.0
        %717 = vmatprep.subr.mxu0 0.0
        %718 = vmatpush1.msra.mxu0 0.0
        %719 = vmatprep.subr.mxu0 0.0
        %720 = vmatpush1.msra.mxu0 0.0
        %721 = vmatprep.subr.mxu0 0.0
        %722 = vmatpush1.msra.mxu0 0.0
        %723 = vmatprep.subr.mxu0 0.0
        %724 = vmatpush1.msra.mxu0 0.0
        %725 = vmatprep.subr.mxu0 0.0
        %726 = vmatpush1.msra.mxu0 0.0
        %727 = vmatprep.mubr.f32.mxu0 0.0
        %v728 = vand.u32 %v312, 4294901760
        %729 = vmatmul.mubr.f32.gmra.mrb[0].mxu0 %v728
        %v730 = vpop.f32.mrb[0].mxu0
        %v731 = vadd.f32 %v646, %v730
        %v732 = vpop.f32.mrb[0].mxu0
        %733 = vmatprep.mubr.f32.mxu0 0.0
        %v734 = vand.u32 %v315, 4294901760
        %735 = vmatmul.mubr.f32.gmra.mrb[0].mxu0 %v734
        %v736 = vpop.f32.mrb[0].mxu0
        %v737 = vadd.f32 %v654, %v736
        %v738 = vpop.f32.mrb[0].mxu0
        %739 = vdwg.mxu0
        %740 = vmatprep.subr.mxu0 0.0
        %v741 = vand.u32 %v282, 4294901760
        %742 = vmatpush1.msra.mxu0 %v741
        %743 = vmatprep.subr.mxu0 0.0
        %v744 = vand.u32 %v283, 4294901760
        %745 = vmatpush1.msra.mxu0 %v744
        %746 = vmatprep.subr.mxu0 0.0
        %747 = vmatpush1.msra.mxu0 0.0
        %748 = vmatprep.subr.mxu0 0.0
        %749 = vmatpush1.msra.mxu0 0.0
        %750 = vmatprep.subr.mxu0 0.0
        %751 = vmatpush1.msra.mxu0 0.0
        %752 = vmatprep.subr.mxu0 0.0
        %753 = vmatpush1.msra.mxu0 0.0
        %754 = vmatprep.subr.mxu0 0.0
        %755 = vmatpush1.msra.mxu0 0.0
        %756 = vmatprep.subr.mxu0 0.0
        %757 = vmatpush1.msra.mxu0 0.0
        %758 = vmatprep.subr.mxu0 0.0
        %759 = vmatpush1.msra.mxu0 0.0
        %760 = vmatprep.subr.mxu0 0.0
        %761 = vmatpush1.msra.mxu0 0.0
        %762 = vmatprep.subr.mxu0 0.0
        %763 = vmatpush1.msra.mxu0 0.0
        %764 = vmatprep.subr.mxu0 0.0
        %765 = vmatpush1.msra.mxu0 0.0
        %766 = vmatprep.subr.mxu0 0.0
        %767 = vmatpush1.msra.mxu0 0.0
        %768 = vmatprep.subr.mxu0 0.0
        %769 = vmatpush1.msra.mxu0 0.0
        %770 = vmatprep.subr.mxu0 0.0
        %771 = vmatpush1.msra.mxu0 0.0
        %772 = vmatprep.subr.mxu0 0.0
        %773 = vmatpush1.msra.mxu0 0.0
        %774 = vmatprep.subr.mxu0 0.0
        %775 = vmatpush1.msra.mxu0 0.0
        %776 = vmatprep.subr.mxu0 0.0
        %777 = vmatpush1.msra.mxu0 0.0
        %778 = vmatprep.subr.mxu0 0.0
        %779 = vmatpush1.msra.mxu0 0.0
        %780 = vmatprep.subr.mxu0 0.0
        %781 = vmatpush1.msra.mxu0 0.0
        %782 = vmatprep.subr.mxu0 0.0
        %783 = vmatpush1.msra.mxu0 0.0
        %784 = vmatprep.subr.mxu0 0.0
        %785 = vmatpush1.msra.mxu0 0.0
        %786 = vmatprep.subr.mxu0 0.0
        %787 = vmatpush1.msra.mxu0 0.0
        %788 = vmatprep.subr.mxu0 0.0
        %789 = vmatpush1.msra.mxu0 0.0
        %790 = vmatprep.subr.mxu0 0.0
        %791 = vmatpush1.msra.mxu0 0.0
        %792 = vmatprep.subr.mxu0 0.0
        %793 = vmatpush1.msra.mxu0 0.0
        %794 = vmatprep.subr.mxu0 0.0
        %795 = vmatpush1.msra.mxu0 0.0
        %796 = vmatprep.subr.mxu0 0.0
        %797 = vmatpush1.msra.mxu0 0.0
        %798 = vmatprep.subr.mxu0 0.0
        %799 = vmatpush1.msra.mxu0 0.0
        %800 = vmatprep.subr.mxu0 0.0
        %801 = vmatpush1.msra.mxu0 0.0
        %802 = vmatprep.subr.mxu0 0.0
        %803 = vmatpush1.msra.mxu0 0.0
        %804 = vmatprep.subr.mxu0 0.0
        %805 = vmatpush1.msra.mxu0 0.0
        %806 = vmatprep.mubr.f32.mxu0 0.0
        %v807 = vand.u32 %v312, 4294901760
        %808 = vmatmul.mubr.f32.gmra.mrb[0].mxu0 %v807
        %v809 = vpop.f32.mrb[0].mxu0
        %v810 = vadd.f32 %v731, %v809
        %v811 = vpop.f32.mrb[0].mxu0
        %812 = vmatprep.mubr.f32.mxu0 0.0
        %v813 = vand.u32 %v315, 4294901760
        %814 = vmatmul.mubr.f32.gmra.mrb[0].mxu0 %v813
        %v815 = vpop.f32.mrb[0].mxu0
        %v816 = vadd.f32 %v737, %v815
        %v817 = vpop.f32.mrb[0].mxu0
        %818 = vdwg.mxu0
        %vm819 = vcmask 523264
        %820 = vst.msk [vmem:[%s244] sm:$0xff] %vm819, %v810
        %821 = vst.msk [vmem:[%s244 + $0x8] sm:$0xff] %vm819, %v816
        %s822 = sld [smem:[#allocation2 + $0x80]]
        %v823 = vstv %s822
        %v824 = vmul.f32 %v246, %v823
        %v825 = vmul.f32 %v247, %v823
        %s826 = sld [smem:[#allocation2 + $0x81]]
        %v827 = vstv %s826
        %v828 = vmul.f32 %v249, %v827
        %v829 = vmul.f32 %v250, %v827
        %v830 = vadd.f32 %v824, %v828
        %v831 = vadd.f32 %v825, %v829
        %s832 = sld [smem:[#allocation2 + $0x82]]
        %v833 = vstv %s832
        %v834 = vmul.f32 %v252, %v833
        %v835 = vmul.f32 %v253, %v833
        %v836 = vadd.f32 %v830, %v834
        %v837 = vadd.f32 %v831, %v835
        %s838 = sld [smem:[#allocation2 + $0x83]]
        %v839 = vstv %s838
        %v840 = vmul.f32 %v255, %v839
        %v841 = vmul.f32 %v256, %v839
        %v842 = vadd.f32 %v836, %v840
        %v843 = vadd.f32 %v837, %v841
        %s844 = sld [smem:[#allocation5 + $0x1]]
        %v845 = vstv %s844
        %v846 = vadd.f32 %v842, %v845
        %v847 = vadd.f32 %v843, %v845
        %v849 = vsel %vm310, %v846, 0
        %v852 = vsel %vm310, %v847, 0
        %854 = vmatprep.subr.mxu0 0.0
        %v855 = vand.u32 %v282, 4294901760
        %856 = vmatpush1.msra.mxu0 %v855
        %857 = vmatprep.subr.mxu0 0.0
        %v858 = vand.u32 %v283, 4294901760
        %859 = vmatpush1.msra.mxu0 %v858
        %860 = vmatprep.subr.mxu0 0.0
        %861 = vmatpush1.msra.mxu0 0.0
        %862 = vmatprep.subr.mxu0 0.0
        %863 = vmatpush1.msra.mxu0 0.0
        %864 = vmatprep.subr.mxu0 0.0
        %865 = vmatpush1.msra.mxu0 0.0
        %866 = vmatprep.subr.mxu0 0.0
        %867 = vmatpush1.msra.mxu0 0.0
        %868 = vmatprep.subr.mxu0 0.0
        %869 = vmatpush1.msra.mxu0 0.0
        %870 = vmatprep.subr.mxu0 0.0
        %871 = vmatpush1.msra.mxu0 0.0
        %872 = vmatprep.subr.mxu0 0.0
        %873 = vmatpush1.msra.mxu0 0.0
        %874 = vmatprep.subr.mxu0 0.0
        %875 = vmatpush1.msra.mxu0 0.0
        %876 = vmatprep.subr.mxu0 0.0
        %877 = vmatpush1.msra.mxu0 0.0
        %878 = vmatprep.subr.mxu0 0.0
        %879 = vmatpush1.msra.mxu0 0.0
        %880 = vmatprep.subr.mxu0 0.0
        %881 = vmatpush1.msra.mxu0 0.0
        %882 = vmatprep.subr.mxu0 0.0
        %883 = vmatpush1.msra.mxu0 0.0
        %884 = vmatprep.subr.mxu0 0.0
        %885 = vmatpush1.msra.mxu0 0.0
        %886 = vmatprep.subr.mxu0 0.0
        %887 = vmatpush1.msra.mxu0 0.0
        %888 = vmatprep.subr.mxu0 0.0
        %889 = vmatpush1.msra.mxu0 0.0
        %890 = vmatprep.subr.mxu0 0.0
        %891 = vmatpush1.msra.mxu0 0.0
        %892 = vmatprep.subr.mxu0 0.0
        %893 = vmatpush1.msra.mxu0 0.0
        %894 = vmatprep.subr.mxu0 0.0
        %895 = vmatpush1.msra.mxu0 0.0
        %896 = vmatprep.subr.mxu0 0.0
        %897 = vmatpush1.msra.mxu0 0.0
        %898 = vmatprep.subr.mxu0 0.0
        %899 = vmatpush1.msra.mxu0 0.0
        %900 = vmatprep.subr.mxu0 0.0
        %901 = vmatpush1.msra.mxu0 0.0
        %902 = vmatprep.subr.mxu0 0.0
        %903 = vmatpush1.msra.mxu0 0.0
        %904 = vmatprep.subr.mxu0 0.0
        %905 = vmatpush1.msra.mxu0 0.0
        %906 = vmatprep.subr.mxu0 0.0
        %907 = vmatpush1.msra.mxu0 0.0
        %908 = vmatprep.subr.mxu0 0.0
        %909 = vmatpush1.msra.mxu0 0.0
        %910 = vmatprep.subr.mxu0 0.0
        %911 = vmatpush1.msra.mxu0 0.0
        %912 = vmatprep.subr.mxu0 0.0
        %913 = vmatpush1.msra.mxu0 0.0
        %914 = vmatprep.subr.mxu0 0.0
        %915 = vmatpush1.msra.mxu0 0.0
        %916 = vmatprep.subr.mxu0 0.0
        %917 = vmatpush1.msra.mxu0 0.0
        %918 = vmatprep.subr.mxu0 0.0
        %919 = vmatpush1.msra.mxu0 0.0
        %920 = vmatprep.mubr.f32.mxu0 0.0
        %v921 = vand.u32 %v849, 4294901760
        %v922 = vsub.f32 %v849, %v921
        %v923 = vand.u32 %v922, 4294901760
        %v924 = vsub.f32 %v922, %v923
        %v925 = vand.u32 %v924, 4294901760
        %926 = vmatmul.mubr.f32.gmra.mrb[0].mxu0 %v925
        %v927 = vpop.f32.mrb[0].mxu0
        %v928 = vadd.f32 0.0, %v927
        %v929 = vpop.f32.mrb[0].mxu0
        %930 = vmatprep.mubr.f32.mxu0 0.0
        %v931 = vand.u32 %v852, 4294901760
        %v932 = vsub.f32 %v852, %v931
        %v933 = vand.u32 %v932, 4294901760
        %v934 = vsub.f32 %v932, %v933
        %v935 = vand.u32 %v934, 4294901760
        %936 = vmatmul.mubr.f32.gmra.mrb[0].mxu0 %v935
        %v937 = vpop.f32.mrb[0].mxu0
        %v938 = vadd.f32 0.0, %v937
        %v939 = vpop.f32.mrb[0].mxu0
        %940 = vdwg.mxu0
        %941 = vmatprep.subr.mxu0 0.0
        %v942 = vand.u32 %v282, 4294901760
        %v943 = vsub.f32 %v282, %v942
        %v944 = vand.u32 %v943, 4294901760
        %v945 = vsub.f32 %v943, %v944
        %v946 = vand.u32 %v945, 4294901760
        %947 = vmatpush1.msra.mxu0 %v946
        %948 = vmatprep.subr.mxu0 0.0
        %v949 = vand.u32 %v283, 4294901760
        %v950 = vsub.f32 %v283, %v949
        %v951 = vand.u32 %v950, 4294901760
        %v952 = vsub.f32 %v950, %v951
        %v953 = vand.u32 %v952, 4294901760
        %954 = vmatpush1.msra.mxu0 %v953
        %955 = vmatprep.subr.mxu0 0.0
        %956 = vmatpush1.msra.mxu0 0.0
        %957 = vmatprep.subr.mxu0 0.0
        %958 = vmatpush1.msra.mxu0 0.0
        %959 = vmatprep.subr.mxu0 0.0
        %960 = vmatpush1.msra.mxu0 0.0
        %961 = vmatprep.subr.mxu0 0.0
        %962 = vmatpush1.msra.mxu0 0.0
        %963 = vmatprep.subr.mxu0 0.0
        %964 = vmatpush1.msra.mxu0 0.0
        %965 = vmatprep.subr.mxu0 0.0
        %966 = vmatpush1.msra.mxu0 0.0
        %967 = vmatprep.subr.mxu0 0.0
        %968 = vmatpush1.msra.mxu0 0.0
        %969 = vmatprep.subr.mxu0 0.0
        %970 = vmatpush1.msra.mxu0 0.0
        %971 = vmatprep.subr.mxu0 0.0
        %972 = vmatpush1.msra.mxu0 0.0
        %973 = vmatprep.subr.mxu0 0.0
        %974 = vmatpush1.msra.mxu0 0.0
        %975 = vmatprep.subr.mxu0 0.0
        %976 = vmatpush1.msra.mxu0 0.0
        %977 = vmatprep.subr.mxu0 0.0
        %978 = vmatpush1.msra.mxu0 0.0
        %979 = vmatprep.subr.mxu0 0.0
        %980 = vmatpush1.msra.mxu0 0.0
        %981 = vmatprep.subr.mxu0 0.0
        %982 = vmatpush1.msra.mxu0 0.0
        %983 = vmatprep.subr.mxu0 0.0
        %984 = vmatpush1.msra.mxu0 0.0
        %985 = vmatprep.subr.mxu0 0.0
        %986 = vmatpush1.msra.mxu0 0.0
        %987 = vmatprep.subr.mxu0 0.0
        %988 = vmatpush1.msra.mxu0 0.0
        %989 = vmatprep.subr.mxu0 0.0
        %990 = vmatpush1.msra.mxu0 0.0
        %991 = vmatprep.subr.mxu0 0.0
        %992 = vmatpush1.msra.mxu0 0.0
        %993 = vmatprep.subr.mxu0 0.0
        %994 = vmatpush1.msra.mxu0 0.0
        %995 = vmatprep.subr.mxu0 0.0
        %996 = vmatpush1.msra.mxu0 0.0
        %997 = vmatprep.subr.mxu0 0.0
        %998 = vmatpush1.msra.mxu0 0.0
        %999 = vmatprep.subr.mxu0 0.0
        %1000 = vmatpush1.msra.mxu0 0.0
        %1001 = vmatprep.subr.mxu0 0.0
        %1002 = vmatpush1.msra.mxu0 0.0
        %1003 = vmatprep.subr.mxu0 0.0
        %1004 = vmatpush1.msra.mxu0 0.0
        %1005 = vmatprep.subr.mxu0 0.0
        %1006 = vmatpush1.msra.mxu0 0.0
        %1007 = vmatprep.subr.mxu0 0.0
        %1008 = vmatpush1.msra.mxu0 0.0
        %1009 = vmatprep.subr.mxu0 0.0
        %1010 = vmatpush1.msra.mxu0 0.0
        %1011 = vmatprep.subr.mxu0 0.0
        %1012 = vmatpush1.msra.mxu0 0.0
        %1013 = vmatprep.subr.mxu0 0.0
        %1014 = vmatpush1.msra.mxu0 0.0
        %1015 = vmatprep.mubr.f32.mxu0 0.0
        %v1016 = vand.u32 %v849, 4294901760
        %1017 = vmatmul.mubr.f32.gmra.mrb[0].mxu0 %v1016
        %v1018 = vpop.f32.mrb[0].mxu0
        %v1019 = vadd.f32 %v928, %v1018
        %v1020 = vpop.f32.mrb[0].mxu0
        %1021 = vmatprep.mubr.f32.mxu0 0.0
        %v1022 = vand.u32 %v852, 4294901760
        %1023 = vmatmul.mubr.f32.gmra.mrb[0].mxu0 %v1022
        %v1024 = vpop.f32.mrb[0].mxu0
        %v1025 = vadd.f32 %v938, %v1024
        %v1026 = vpop.f32.mrb[0].mxu0
        %1027 = vdwg.mxu0
        %1028 = vmatprep.subr.mxu0 0.0
        %v1029 = vand.u32 %v282, 4294901760
        %v1030 = vsub.f32 %v282, %v1029
        %1031 = vmatpush1.msra.mxu0 %v1030
        %1032 = vmatprep.subr.mxu0 0.0
        %v1033 = vand.u32 %v283, 4294901760
        %v1034 = vsub.f32 %v283, %v1033
        %1035 = vmatpush1.msra.mxu0 %v1034
        %1036 = vmatprep.subr.mxu0 0.0
        %1037 = vmatpush1.msra.mxu0 0.0
        %1038 = vmatprep.subr.mxu0 0.0
        %1039 = vmatpush1.msra.mxu0 0.0
        %1040 = vmatprep.subr.mxu0 0.0
        %1041 = vmatpush1.msra.mxu0 0.0
        %1042 = vmatprep.subr.mxu0 0.0
        %1043 = vmatpush1.msra.mxu0 0.0
        %1044 = vmatprep.subr.mxu0 0.0
        %1045 = vmatpush1.msra.mxu0 0.0
        %1046 = vmatprep.subr.mxu0 0.0
        %1047 = vmatpush1.msra.mxu0 0.0
        %1048 = vmatprep.subr.mxu0 0.0
        %1049 = vmatpush1.msra.mxu0 0.0
        %1050 = vmatprep.subr.mxu0 0.0
        %1051 = vmatpush1.msra.mxu0 0.0
        %1052 = vmatprep.subr.mxu0 0.0
        %1053 = vmatpush1.msra.mxu0 0.0
        %1054 = vmatprep.subr.mxu0 0.0
        %1055 = vmatpush1.msra.mxu0 0.0
        %1056 = vmatprep.subr.mxu0 0.0
        %1057 = vmatpush1.msra.mxu0 0.0
        %1058 = vmatprep.subr.mxu0 0.0
        %1059 = vmatpush1.msra.mxu0 0.0
        %1060 = vmatprep.subr.mxu0 0.0
        %1061 = vmatpush1.msra.mxu0 0.0
        %1062 = vmatprep.subr.mxu0 0.0
        %1063 = vmatpush1.msra.mxu0 0.0
        %1064 = vmatprep.subr.mxu0 0.0
        %1065 = vmatpush1.msra.mxu0 0.0
        %1066 = vmatprep.subr.mxu0 0.0
        %1067 = vmatpush1.msra.mxu0 0.0
        %1068 = vmatprep.subr.mxu0 0.0
        %1069 = vmatpush1.msra.mxu0 0.0
        %1070 = vmatprep.subr.mxu0 0.0
        %1071 = vmatpush1.msra.mxu0 0.0
        %1072 = vmatprep.subr.mxu0 0.0
        %1073 = vmatpush1.msra.mxu0 0.0
        %1074 = vmatprep.subr.mxu0 0.0
        %1075 = vmatpush1.msra.mxu0 0.0
        %1076 = vmatprep.subr.mxu0 0.0
        %1077 = vmatpush1.msra.mxu0 0.0
        %1078 = vmatprep.subr.mxu0 0.0
        %1079 = vmatpush1.msra.mxu0 0.0
        %1080 = vmatprep.subr.mxu0 0.0
        %1081 = vmatpush1.msra.mxu0 0.0
        %1082 = vmatprep.subr.mxu0 0.0
        %1083 = vmatpush1.msra.mxu0 0.0
        %1084 = vmatprep.subr.mxu0 0.0
        %1085 = vmatpush1.msra.mxu0 0.0
        %1086 = vmatprep.subr.mxu0 0.0
        %1087 = vmatpush1.msra.mxu0 0.0
        %1088 = vmatprep.subr.mxu0 0.0
        %1089 = vmatpush1.msra.mxu0 0.0
        %1090 = vmatprep.subr.mxu0 0.0
        %1091 = vmatpush1.msra.mxu0 0.0
        %1092 = vmatprep.subr.mxu0 0.0
        %1093 = vmatpush1.msra.mxu0 0.0
        %1094 = vmatprep.subr.mxu0 0.0
        %1095 = vmatpush1.msra.mxu0 0.0
        %1096 = vmatprep.mubr.f32.mxu0 0.0
        %v1097 = vand.u32 %v849, 4294901760
        %v1098 = vsub.f32 %v849, %v1097
        %1099 = vmatmul.mubr.f32.gmra.mrb[0].mxu0 %v1098
        %v1100 = vpop.f32.mrb[0].mxu0
        %v1101 = vadd.f32 %v1019, %v1100
        %v1102 = vpop.f32.mrb[0].mxu0
        %1103 = vmatprep.mubr.f32.mxu0 0.0
        %v1104 = vand.u32 %v852, 4294901760
        %v1105 = vsub.f32 %v852, %v1104
        %1106 = vmatmul.mubr.f32.gmra.mrb[0].mxu0 %v1105
        %v1107 = vpop.f32.mrb[0].mxu0
        %v1108 = vadd.f32 %v1025, %v1107
        %v1109 = vpop.f32.mrb[0].mxu0
        %1110 = vdwg.mxu0
        %1111 = vmatprep.subr.mxu0 0.0
        %v1112 = vand.u32 %v282, 4294901760
        %1113 = vmatpush1.msra.mxu0 %v1112
        %1114 = vmatprep.subr.mxu0 0.0
        %v1115 = vand.u32 %v283, 4294901760
        %1116 = vmatpush1.msra.mxu0 %v1115
        %1117 = vmatprep.subr.mxu0 0.0
        %1118 = vmatpush1.msra.mxu0 0.0
        %1119 = vmatprep.subr.mxu0 0.0
        %1120 = vmatpush1.msra.mxu0 0.0
        %1121 = vmatprep.subr.mxu0 0.0
        %1122 = vmatpush1.msra.mxu0 0.0
        %1123 = vmatprep.subr.mxu0 0.0
        %1124 = vmatpush1.msra.mxu0 0.0
        %1125 = vmatprep.subr.mxu0 0.0
        %1126 = vmatpush1.msra.mxu0 0.0
        %1127 = vmatprep.subr.mxu0 0.0
        %1128 = vmatpush1.msra.mxu0 0.0
        %1129 = vmatprep.subr.mxu0 0.0
        %1130 = vmatpush1.msra.mxu0 0.0
        %1131 = vmatprep.subr.mxu0 0.0
        %1132 = vmatpush1.msra.mxu0 0.0
        %1133 = vmatprep.subr.mxu0 0.0
        %1134 = vmatpush1.msra.mxu0 0.0
        %1135 = vmatprep.subr.mxu0 0.0
        %1136 = vmatpush1.msra.mxu0 0.0
        %1137 = vmatprep.subr.mxu0 0.0
        %1138 = vmatpush1.msra.mxu0 0.0
        %1139 = vmatprep.subr.mxu0 0.0
        %1140 = vmatpush1.msra.mxu0 0.0
        %1141 = vmatprep.subr.mxu0 0.0
        %1142 = vmatpush1.msra.mxu0 0.0
        %1143 = vmatprep.subr.mxu0 0.0
        %1144 = vmatpush1.msra.mxu0 0.0
        %1145 = vmatprep.subr.mxu0 0.0
        %1146 = vmatpush1.msra.mxu0 0.0
        %1147 = vmatprep.subr.mxu0 0.0
        %1148 = vmatpush1.msra.mxu0 0.0
        %1149 = vmatprep.subr.mxu0 0.0
        %1150 = vmatpush1.msra.mxu0 0.0
        %1151 = vmatprep.subr.mxu0 0.0
        %1152 = vmatpush1.msra.mxu0 0.0
        %1153 = vmatprep.subr.mxu0 0.0
        %1154 = vmatpush1.msra.mxu0 0.0
        %1155 = vmatprep.subr.mxu0 0.0
        %1156 = vmatpush1.msra.mxu0 0.0
        %1157 = vmatprep.subr.mxu0 0.0
        %1158 = vmatpush1.msra.mxu0 0.0
        %1159 = vmatprep.subr.mxu0 0.0
        %1160 = vmatpush1.msra.mxu0 0.0
        %1161 = vmatprep.subr.mxu0 0.0
        %1162 = vmatpush1.msra.mxu0 0.0
        %1163 = vmatprep.subr.mxu0 0.0
        %1164 = vmatpush1.msra.mxu0 0.0
        %1165 = vmatprep.subr.mxu0 0.0
        %1166 = vmatpush1.msra.mxu0 0.0
        %1167 = vmatprep.subr.mxu0 0.0
        %1168 = vmatpush1.msra.mxu0 0.0
        %1169 = vmatprep.subr.mxu0 0.0
        %1170 = vmatpush1.msra.mxu0 0.0
        %1171 = vmatprep.subr.mxu0 0.0
        %1172 = vmatpush1.msra.mxu0 0.0
        %1173 = vmatprep.subr.mxu0 0.0
        %1174 = vmatpush1.msra.mxu0 0.0
        %1175 = vmatprep.subr.mxu0 0.0
        %1176 = vmatpush1.msra.mxu0 0.0
        %1177 = vmatprep.mubr.f32.mxu0 0.0
        %v1178 = vand.u32 %v849, 4294901760
        %v1179 = vsub.f32 %v849, %v1178
        %v1180 = vand.u32 %v1179, 4294901760
        %1181 = vmatmul.mubr.f32.gmra.mrb[0].mxu0 %v1180
        %v1182 = vpop.f32.mrb[0].mxu0
        %v1183 = vadd.f32 %v1101, %v1182
        %v1184 = vpop.f32.mrb[0].mxu0
        %1185 = vmatprep.mubr.f32.mxu0 0.0
        %v1186 = vand.u32 %v852, 4294901760
        %v1187 = vsub.f32 %v852, %v1186
        %v1188 = vand.u32 %v1187, 4294901760
        %1189 = vmatmul.mubr.f32.gmra.mrb[0].mxu0 %v1188
        %v1190 = vpop.f32.mrb[0].mxu0
        %v1191 = vadd.f32 %v1108, %v1190
        %v1192 = vpop.f32.mrb[0].mxu0
        %1193 = vdwg.mxu0
        %1194 = vmatprep.subr.mxu0 0.0
        %v1195 = vand.u32 %v282, 4294901760
        %v1196 = vsub.f32 %v282, %v1195
        %v1197 = vand.u32 %v1196, 4294901760
        %1198 = vmatpush1.msra.mxu0 %v1197
        %1199 = vmatprep.subr.mxu0 0.0
        %v1200 = vand.u32 %v283, 4294901760
        %v1201 = vsub.f32 %v283, %v1200
        %v1202 = vand.u32 %v1201, 4294901760
        %1203 = vmatpush1.msra.mxu0 %v1202
        %1204 = vmatprep.subr.mxu0 0.0
        %1205 = vmatpush1.msra.mxu0 0.0
        %1206 = vmatprep.subr.mxu0 0.0
        %1207 = vmatpush1.msra.mxu0 0.0
        %1208 = vmatprep.subr.mxu0 0.0
        %1209 = vmatpush1.msra.mxu0 0.0
        %1210 = vmatprep.subr.mxu0 0.0
        %1211 = vmatpush1.msra.mxu0 0.0
        %1212 = vmatprep.subr.mxu0 0.0
        %1213 = vmatpush1.msra.mxu0 0.0
        %1214 = vmatprep.subr.mxu0 0.0
        %1215 = vmatpush1.msra.mxu0 0.0
        %1216 = vmatprep.subr.mxu0 0.0
        %1217 = vmatpush1.msra.mxu0 0.0
        %1218 = vmatprep.subr.mxu0 0.0
        %1219 = vmatpush1.msra.mxu0 0.0
        %1220 = vmatprep.subr.mxu0 0.0
        %1221 = vmatpush1.msra.mxu0 0.0
        %1222 = vmatprep.subr.mxu0 0.0
        %1223 = vmatpush1.msra.mxu0 0.0
        %1224 = vmatprep.subr.mxu0 0.0
        %1225 = vmatpush1.msra.mxu0 0.0
        %1226 = vmatprep.subr.mxu0 0.0
        %1227 = vmatpush1.msra.mxu0 0.0
        %1228 = vmatprep.subr.mxu0 0.0
        %1229 = vmatpush1.msra.mxu0 0.0
        %1230 = vmatprep.subr.mxu0 0.0
        %1231 = vmatpush1.msra.mxu0 0.0
        %1232 = vmatprep.subr.mxu0 0.0
        %1233 = vmatpush1.msra.mxu0 0.0
        %1234 = vmatprep.subr.mxu0 0.0
        %1235 = vmatpush1.msra.mxu0 0.0
        %1236 = vmatprep.subr.mxu0 0.0
        %1237 = vmatpush1.msra.mxu0 0.0
        %1238 = vmatprep.subr.mxu0 0.0
        %1239 = vmatpush1.msra.mxu0 0.0
        %1240 = vmatprep.subr.mxu0 0.0
        %1241 = vmatpush1.msra.mxu0 0.0
        %1242 = vmatprep.subr.mxu0 0.0
        %1243 = vmatpush1.msra.mxu0 0.0
        %1244 = vmatprep.subr.mxu0 0.0
        %1245 = vmatpush1.msra.mxu0 0.0
        %1246 = vmatprep.subr.mxu0 0.0
        %1247 = vmatpush1.msra.mxu0 0.0
        %1248 = vmatprep.subr.mxu0 0.0
        %1249 = vmatpush1.msra.mxu0 0.0
        %1250 = vmatprep.subr.mxu0 0.0
        %1251 = vmatpush1.msra.mxu0 0.0
        %1252 = vmatprep.subr.mxu0 0.0
        %1253 = vmatpush1.msra.mxu0 0.0
        %1254 = vmatprep.subr.mxu0 0.0
        %1255 = vmatpush1.msra.mxu0 0.0
        %1256 = vmatprep.subr.mxu0 0.0
        %1257 = vmatpush1.msra.mxu0 0.0
        %1258 = vmatprep.subr.mxu0 0.0
        %1259 = vmatpush1.msra.mxu0 0.0
        %1260 = vmatprep.subr.mxu0 0.0
        %1261 = vmatpush1.msra.mxu0 0.0
        %1262 = vmatprep.subr.mxu0 0.0
        %1263 = vmatpush1.msra.mxu0 0.0
        %1264 = vmatprep.mubr.f32.mxu0 0.0
        %v1265 = vand.u32 %v849, 4294901760
        %1266 = vmatmul.mubr.f32.gmra.mrb[0].mxu0 %v1265
        %v1267 = vpop.f32.mrb[0].mxu0
        %v1268 = vadd.f32 %v1183, %v1267
        %v1269 = vpop.f32.mrb[0].mxu0
        %1270 = vmatprep.mubr.f32.mxu0 0.0
        %v1271 = vand.u32 %v852, 4294901760
        %1272 = vmatmul.mubr.f32.gmra.mrb[0].mxu0 %v1271
        %v1273 = vpop.f32.mrb[0].mxu0
        %v1274 = vadd.f32 %v1191, %v1273
        %v1275 = vpop.f32.mrb[0].mxu0
        %1276 = vdwg.mxu0
        %1277 = vmatprep.subr.mxu0 0.0
        %v1278 = vand.u32 %v282, 4294901760
        %1279 = vmatpush1.msra.mxu0 %v1278
        %1280 = vmatprep.subr.mxu0 0.0
        %v1281 = vand.u32 %v283, 4294901760
        %1282 = vmatpush1.msra.mxu0 %v1281
        %1283 = vmatprep.subr.mxu0 0.0
        %1284 = vmatpush1.msra.mxu0 0.0
        %1285 = vmatprep.subr.mxu0 0.0
        %1286 = vmatpush1.msra.mxu0 0.0
        %1287 = vmatprep.subr.mxu0 0.0
        %1288 = vmatpush1.msra.mxu0 0.0
        %1289 = vmatprep.subr.mxu0 0.0
        %1290 = vmatpush1.msra.mxu0 0.0
        %1291 = vmatprep.subr.mxu0 0.0
        %1292 = vmatpush1.msra.mxu0 0.0
        %1293 = vmatprep.subr.mxu0 0.0
        %1294 = vmatpush1.msra.mxu0 0.0
        %1295 = vmatprep.subr.mxu0 0.0
        %1296 = vmatpush1.msra.mxu0 0.0
        %1297 = vmatprep.subr.mxu0 0.0
        %1298 = vmatpush1.msra.mxu0 0.0
        %1299 = vmatprep.subr.mxu0 0.0
        %1300 = vmatpush1.msra.mxu0 0.0
        %1301 = vmatprep.subr.mxu0 0.0
        %1302 = vmatpush1.msra.mxu0 0.0
        %1303 = vmatprep.subr.mxu0 0.0
        %1304 = vmatpush1.msra.mxu0 0.0
        %1305 = vmatprep.subr.mxu0 0.0
        %1306 = vmatpush1.msra.mxu0 0.0
        %1307 = vmatprep.subr.mxu0 0.0
        %1308 = vmatpush1.msra.mxu0 0.0
        %1309 = vmatprep.subr.mxu0 0.0
        %1310 = vmatpush1.msra.mxu0 0.0
        %1311 = vmatprep.subr.mxu0 0.0
        %1312 = vmatpush1.msra.mxu0 0.0
        %1313 = vmatprep.subr.mxu0 0.0
        %1314 = vmatpush1.msra.mxu0 0.0
        %1315 = vmatprep.subr.mxu0 0.0
        %1316 = vmatpush1.msra.mxu0 0.0
        %1317 = vmatprep.subr.mxu0 0.0
        %1318 = vmatpush1.msra.mxu0 0.0
        %1319 = vmatprep.subr.mxu0 0.0
        %1320 = vmatpush1.msra.mxu0 0.0
        %1321 = vmatprep.subr.mxu0 0.0
        %1322 = vmatpush1.msra.mxu0 0.0
        %1323 = vmatprep.subr.mxu0 0.0
        %1324 = vmatpush1.msra.mxu0 0.0
        %1325 = vmatprep.subr.mxu0 0.0
        %1326 = vmatpush1.msra.mxu0 0.0
        %1327 = vmatprep.subr.mxu0 0.0
        %1328 = vmatpush1.msra.mxu0 0.0
        %1329 = vmatprep.subr.mxu0 0.0
        %1330 = vmatpush1.msra.mxu0 0.0
        %1331 = vmatprep.subr.mxu0 0.0
        %1332 = vmatpush1.msra.mxu0 0.0
        %1333 = vmatprep.subr.mxu0 0.0
        %1334 = vmatpush1.msra.mxu0 0.0
        %1335 = vmatprep.subr.mxu0 0.0
        %1336 = vmatpush1.msra.mxu0 0.0
        %1337 = vmatprep.subr.mxu0 0.0
        %1338 = vmatpush1.msra.mxu0 0.0
        %1339 = vmatprep.subr.mxu0 0.0
        %1340 = vmatpush1.msra.mxu0 0.0
        %1341 = vmatprep.subr.mxu0 0.0
        %1342 = vmatpush1.msra.mxu0 0.0
        %1343 = vmatprep.mubr.f32.mxu0 0.0
        %v1344 = vand.u32 %v849, 4294901760
        %1345 = vmatmul.mubr.f32.gmra.mrb[0].mxu0 %v1344
        %v1346 = vpop.f32.mrb[0].mxu0
        %v1347 = vadd.f32 %v1268, %v1346
        %v1348 = vpop.f32.mrb[0].mxu0
        %1349 = vmatprep.mubr.f32.mxu0 0.0
        %v1350 = vand.u32 %v852, 4294901760
        %1351 = vmatmul.mubr.f32.gmra.mrb[0].mxu0 %v1350
        %v1352 = vpop.f32.mrb[0].mxu0
        %v1353 = vadd.f32 %v1274, %v1352
        %v1354 = vpop.f32.mrb[0].mxu0
        %1355 = vdwg.mxu0
        %s1356 = scalar_lea.vmem %s244, 16
        %1357 = vst.msk [vmem:[%s1356] sm:$0xff] %vm819, %v1347
        %1358 = vst.msk [vmem:[%s1356 + $0x8] sm:$0xff] %vm819, %v1353
        %s1359 = smul.u32 2, %s24
        %p1360 = scmp.lt.s32.totalorder %s23, 1
        %s1361 = scalar_select %p1360, %s23, 1
        %p1362 = scmp.lt.s32.totalorder %s1359, 1
        %s1363 = scalar_select %p1362, %s1359, 1
        %s1364 = smul.addr %s1361, 4
        %s1365 = sadd.s32 %s1363, %s1364
        %s1366 = smul.addr %s1365, 8
        %s1367 = scalar_lea.vmem %s3, %s1366
        // Predicated region
        $region45: #{upsample_forward.1} parent=31 // pred_check
          %p1368 = pneg %p121
        $region46: #{upsample_forward.1} parent=31 // pred_check_branch
          %1370 = sbr.rel (%p1368) target = $region48
        $region47: #{upsample_forward.1} parent=31 // pred_region
          %s1371 = smul.u32 2, %s24
        $region48: #{upsample_forward.1} parent=31 // pred_fallthru
          _
      $region32: #{upsample_forward.1} parent=5 // pred_fallthru
        _
      %p1372 = scmp.le.s32.totalorder 2, %s14
      // Predicated region
      $region49: #{upsample_forward.1} parent=5 // pred_check
        %p1373 = pneg %p1372
      $region50: #{upsample_forward.1} parent=5 // pred_check_branch
        %1375 = sbr.rel (%p1373) target = $region52
      $region51: #{upsample_forward.1} parent=5 // pred_region
        %s1376 = ssub.s32 %s14, 2
        // Predicated region
        $region53: #{upsample_forward.1} parent=51 // pred_check
          %p1377 = pneg %p127
        $region54: #{upsample_forward.1} parent=51 // pred_check_branch
          %1379 = sbr.rel (%p1377) target = $region56
        $region55: #{upsample_forward.1} parent=51 // pred_region
          %s1380 = smul.u32 2, %s26
          %p1381 = scmp.lt.s32.totalorder %s25, 1
          %s1382 = scalar_select %p1381, %s25, 1
          %p1383 = scmp.lt.s32.totalorder %s1380, 1
          %s1384 = scalar_select %p1383, %s1380, 1
          %s1385 = smul.addr %s1382, 4
          %s1386 = sadd.s32 %s1384, %s1385
          %s1387 = smul.addr %s1386, 8
          %s1388 = scalar_lea.vmem %s3, %s1387
        $region56: #{upsample_forward.1} parent=51 // pred_fallthru
          _
      $region52: #{upsample_forward.1} parent=5 // pred_fallthru
        _
    $region6: #{upsample_forward.1} parent=1 // loop_footer
      %s18 = sadd.s32 1, %s14
    $region7: #{upsample_forward.1} parent=1 // loop_footer_branch
      %13 = sbr.rel target = $region3
    $region8: #{upsample_forward.1} parent=1 // loop_exit
      _
    %1389 = vsyncpa [#allocation3], 1
    %s1390 = scalar_lea.sflag [#allocation3], 1
    %1391 = vsyncpa %s1390, 1
    %1392 = vsyncpa [#allocation4], 1
    %s1393 = scalar_lea.sflag [#allocation4], 1
    %1394 = vsyncpa %s1393, 1
    %1395 = vsyncpa [#allocation6], 1

</llo_original>
